<compile_context>
chip_gen: v6e
topology: v6e:2x2x1
jax: 0.10.0
libtpu: 0.0.40
codegen_flags: <defaults>
</compile_context>

<pallas_src>
import jax
import jax.numpy as jnp
from jax.experimental import pallas as pl
from jax.experimental.pallas import tpu as pltpu


def ln_linear_kernel(x_ref, w_ref, b_ref, o_ref):
    # x_ref: (TM, H) f32 token tile; w_ref: (H, N) bf16 (LN-gamma pre-folded);
    # b_ref: (1, N) f32 (LN-beta pre-folded); o_ref: (TM, N) f32.
    x = x_ref[...].astype(jnp.float32)
    h_inv = 1.0 / x.shape[-1]

    # Single-pass LayerNorm statistics: var = E[x^2] - mean^2 (biased, matches torch LN).
    s = jnp.sum(x, axis=-1, keepdims=True)
    ss = jnp.sum(x * x, axis=-1, keepdims=True)
    mean = s * h_inv
    var = jnp.maximum(ss * h_inv - mean * mean, 0.0)
    xn = (x - mean) * jax.lax.rsqrt(var + 1e-12)

    # bf16 x bf16 -> f32 accumulate on the MXU; LN affine already folded into w/b.
    out = jnp.dot(xn.astype(jnp.bfloat16), w_ref[...],
                  preferred_element_type=jnp.float32)
    o_ref[...] = (out + b_ref[...]).astype(o_ref.dtype)


def _choose_token_tile(m_padded):
    """Pick a sublane-aligned token tile.

    Prefer a tile that divides m_padded exactly with an even step count >= 4
    (balanced across v7x's two TensorCores, enough steps for double buffering
    on every generation). Fall back to any exact divisor with >= 2 steps, then
    to 128 (padding path)."""
    fallback = None
    for tm in range(min(256, m_padded), 7, -8):
        if m_padded % tm:
            continue
        g = m_padded // tm
        if g >= 4 and g % 2 == 0:
            return tm
        if fallback is None and g >= 2:
            fallback = tm
    if fallback is not None:
        return fallback
    return min(128, m_padded)


def layernorm_linear(x, gamma, beta, w, b):
    """x: (B, S, H) f32; gamma/beta: (H,); w: (H, N) == torch_weight.T; b: (N,).

    Returns (B, S, N) f32 == Linear(LayerNorm(x))."""
    B, S, H = x.shape
    N = w.shape[1]
    M = B * S

    Mp = pl.cdiv(M, 8) * 8
    tm = _choose_token_tile(Mp)
    grid = pl.cdiv(Mp, tm)
    Mp = tm * grid  # total padded rows (== M on the no-pad path)

    x2 = x.reshape(M, H)
    if Mp != M:
        # Fallback only (ragged M): zero rows are LN-safe and sliced off below.
        x2 = jnp.pad(x2, ((0, Mp - M), (0, 0)))

    # Fold LayerNorm affine into the Linear. Bias fold is done fully in f32
    # before the weight is cast to bf16 (keeps the bias path exact).
    w_f32 = w.astype(jnp.float32)
    w_fold = (gamma.astype(jnp.float32)[:, None] * w_f32).astype(jnp.bfloat16)
    b_fold = (beta.astype(jnp.float32) @ w_f32 + b.astype(jnp.float32)).reshape(1, N)

    cost = pl.CostEstimate(
        flops=2 * Mp * H * N + 6 * Mp * H,
        transcendentals=0,
        bytes_accessed=(Mp * H * 4      # x in
                        + H * N * 2     # folded weight (bf16)
                        + N * 4         # folded bias
                        + Mp * N * 4),  # output
    )

    out2 = pl.pallas_call(
        ln_linear_kernel,
        out_shape=jax.ShapeDtypeStruct((Mp, N), x.dtype),
        grid_spec=pltpu.PrefetchScalarGridSpec(
            num_scalar_prefetch=0,
            grid=(grid,),
            in_specs=[
                # x tile: streamed (double-buffered) along the token grid.
                pl.BlockSpec((tm, H), lambda i: (i, 0)),
                # Folded weight: constant index map -> resident; single buffer.
                pl.BlockSpec((H, N), lambda i: (0, 0),
                             pipeline_mode=pl.Buffered(1)),
                # Folded bias: constant index map -> resident; single buffer.
                pl.BlockSpec((1, N), lambda i: (0, 0),
                             pipeline_mode=pl.Buffered(1)),
            ],
            out_specs=pl.BlockSpec((tm, N), lambda i: (i, 0)),
        ),
        compiler_params=pltpu.CompilerParams(
            dimension_semantics=("parallel",),
        ),
        cost_estimate=cost,
    )(x2, w_fold, b_fold)

    if Mp != M:
        out2 = out2[:M]
    return out2.reshape(B, S, N)


if __name__ == "__main__":
    # Shapes from the PyTorch module: x190 = randn(1, 384, 256); Linear(256 -> 1024).
    B, S, H, N = 1, 384, 256, 1024

    key = jax.random.PRNGKey(0)
    k_x, k_g, k_b, k_w, k_bias = jax.random.split(key, 5)

    x = jax.random.normal(k_x, (B, S, H), dtype=jnp.float32)
    # Deterministic synthetic parameters (not loaded from a checkpoint).
    gamma = 1.0 + 0.02 * jax.random.normal(k_g, (H,), dtype=jnp.float32)
    beta = 0.02 * jax.random.normal(k_b, (H,), dtype=jnp.float32)
    # Linear weight in (in_features, out_features) layout == PyTorch weight.T
    w = jax.random.normal(k_w, (H, N), dtype=jnp.float32) * (1.0 / jnp.sqrt(H))
    bias = 0.01 * jax.random.normal(k_bias, (N,), dtype=jnp.float32)

    out = layernorm_linear(x, gamma, beta, w, bias)
    out = jax.block_until_ready(out)

    # Plain-JAX f32 reference (matches the PyTorch forward).
    mean = jnp.mean(x, axis=-1, keepdims=True)
    var = jnp.mean((x - mean) ** 2, axis=-1, keepdims=True)
    xn = (x - mean) / jnp.sqrt(var + 1e-12)
    ref = (xn * gamma + beta) @ w + bias

    assert out.shape == (B, S, N)
    err = jnp.max(jnp.abs(out - ref) / (jnp.abs(ref) + 1e-2))
    assert jnp.allclose(out, ref, atol=3e-2, rtol=3e-2), (
        f"mismatch vs reference (max rel err {err})")

    print("KERNEL_OK")
</pallas_src>

<mosaic_0001>
module attributes {stable_mosaic.version = 11 : i64} {
  func.func @ln_linear_kernel(%arg0: i32, %arg1: memref<96x256xf32, #tpu.memory_space<vmem>>, %arg2: memref<256x1024xbf16, #tpu.memory_space<vmem>>, %arg3: memref<1x1024xf32, #tpu.memory_space<vmem>>, %arg4: memref<96x1024xf32, #tpu.memory_space<vmem>>) attributes {dimension_semantics = [#tpu.dimension_semantics<parallel>], iteration_bounds = array<i64: 4>, scalar_prefetch = 0 : i64, scratch_operands = 0 : i64, tpu.core_type = #tpu.core_type<tc>, window_params = [{transform_indices = @transform_0, window_bounds = array<i64: 96, 256>}, {pipeline_mode = #tpu.pipeline_mode<synchronous>, transform_indices = @transform_1, window_bounds = array<i64: 256, 1024>}, {pipeline_mode = #tpu.pipeline_mode<synchronous>, transform_indices = @transform_2, window_bounds = array<i64: 1, 1024>}, {transform_indices = @transform_3, window_bounds = array<i64: 96, 1024>}]} {
    %c0 = arith.constant 0 : index
    %c0_0 = arith.constant 0 : index
    %0 = vector.load %arg1[%c0, %c0_0] : memref<96x256xf32, #tpu.memory_space<vmem>>, vector<96x256xf32>
    %cst = arith.constant dense<0.000000e+00> : vector<96xf32>
    %1 = vector.multi_reduction <add>, %0, %cst [1] : vector<96x256xf32> to vector<96xf32>
    %2 = vector.shape_cast %1 : vector<96xf32> to vector<96x1xf32>
    %3 = arith.mulf %0, %0 : vector<96x256xf32>
    %cst_1 = arith.constant dense<0.000000e+00> : vector<96xf32>
    %4 = vector.multi_reduction <add>, %3, %cst_1 [1] : vector<96x256xf32> to vector<96xf32>
    %5 = vector.shape_cast %4 : vector<96xf32> to vector<96x1xf32>
    %cst_2 = arith.constant 3.906250e-03 : f32
    %6 = vector.broadcast %cst_2 : f32 to vector<96x1xf32>
    %7 = arith.mulf %2, %6 : vector<96x1xf32>
    %cst_3 = arith.constant 3.906250e-03 : f32
    %8 = vector.broadcast %cst_3 : f32 to vector<96x1xf32>
    %9 = arith.mulf %5, %8 : vector<96x1xf32>
    %10 = arith.mulf %7, %7 : vector<96x1xf32>
    %11 = arith.subf %9, %10 : vector<96x1xf32>
    %cst_4 = arith.constant 0.000000e+00 : f32
    %12 = vector.broadcast %cst_4 : f32 to vector<96x1xf32>
    %13 = arith.maximumf %11, %12 : vector<96x1xf32>
    %14 = vector.broadcast %7 : vector<96x1xf32> to vector<96x256xf32>
    %15 = arith.subf %0, %14 : vector<96x256xf32>
    %cst_5 = arith.constant 9.99999996E-13 : f32
    %16 = vector.broadcast %cst_5 : f32 to vector<96x1xf32>
    %17 = arith.addf %13, %16 : vector<96x1xf32>
    %18 = math.rsqrt %17 : vector<96x1xf32>
    %19 = vector.broadcast %18 : vector<96x1xf32> to vector<96x256xf32>
    %20 = arith.mulf %15, %19 : vector<96x256xf32>
    %21 = arith.truncf %20 : vector<96x256xf32> to vector<96x256xbf16>
    %c0_6 = arith.constant 0 : index
    %c0_7 = arith.constant 0 : index
    %22 = vector.load %arg2[%c0_6, %c0_7] : memref<256x1024xbf16, #tpu.memory_space<vmem>>, vector<256x1024xbf16>
    %cst_8 = arith.constant dense<0.000000e+00> : vector<96x1024xf32>
    %23 = tpu.matmul %21, %22, %cst_8 {dimension_numbers = #tpu.dot_dimension_numbers<[1], [0], [0], [1], [0, 0, 1, 1], [], []>} : vector<96x256xbf16>, vector<256x1024xbf16>, vector<96x1024xf32> -> vector<96x1024xf32>
    %c0_9 = arith.constant 0 : index
    %c0_10 = arith.constant 0 : index
    %24 = vector.load %arg3[%c0_9, %c0_10] : memref<1x1024xf32, #tpu.memory_space<vmem>>, vector<1x1024xf32>
    %25 = vector.broadcast %24 : vector<1x1024xf32> to vector<96x1024xf32>
    %26 = arith.addf %23, %25 : vector<96x1024xf32>
    %c0_11 = arith.constant 0 : index
    %c0_12 = arith.constant 0 : index
    %27 = vector.load %arg4[%c0_11, %c0_12] : memref<96x1024xf32, #tpu.memory_space<vmem>>, vector<96x1024xf32>
    tpu.vector_store %arg4[%c0_11, %c0_12], %26 {strides = array<i32>} : memref<96x1024xf32, #tpu.memory_space<vmem>>, vector<96x1024xf32>,
    return
  }
  func.func @transform_0(%arg0: i32) -> (i32, i32) {
    %c0_i32 = arith.constant 0 : i32
    %c0_i32_0 = arith.constant 0 : i32
    return %arg0, %c0_i32 : i32, i32
  }
  func.func @transform_1(%arg0: i32) -> (i32, i32) {
    %c0_i32 = arith.constant 0 : i32
    %c0_i32_0 = arith.constant 0 : i32
    %c0_i32_1 = arith.constant 0 : i32
    return %c0_i32, %c0_i32_0 : i32, i32
  }
  func.func @transform_2(%arg0: i32) -> (i32, i32) {
    %c0_i32 = arith.constant 0 : i32
    %c0_i32_0 = arith.constant 0 : i32
    %c0_i32_1 = arith.constant 0 : i32
    return %c0_i32, %c0_i32_0 : i32, i32
  }
  func.func @transform_3(%arg0: i32) -> (i32, i32) {
    %c0_i32 = arith.constant 0 : i32
    %c0_i32_0 = arith.constant 0 : i32
    return %arg0, %c0_i32 : i32, i32
  }
}

</mosaic_0001>

<llo_original>
// kernel: tpu_custom_call.1
$region0: #{tpu_custom_call.1}
  #allocation0 [shape = 'u32[]', space=smem, size = 0x4, offset = 0x4, fixed_abs, tag = 'smem constant byte address 0x4 - core index']
  #allocation1 [shape = 'u32[144,128]{1,0:T(1,128)}', space=vmem, size = 0x12000, scoped, tag = 'internal scratch']
  %s0 = inlined_call_operand.hbm [shape: f32[384,256], index: 0, kind: input, shape index: {}]
  %s1 = inlined_call_operand.hbm [shape: bf16[256,1024], index: 1, kind: input, shape index: {}]
  %s2 = inlined_call_operand.hbm [shape: f32[1,1024], index: 2, kind: input, shape index: {}]
  %s3 = inlined_call_operand.hbm [shape: f32[384,1024], index: 3, kind: output, shape index: {}]
  %s4 = sld [smem:[#allocation0]]
  $region57: #{tpu_custom_call.1} parent=0
    _
  %s6 = ssub.s32 1, %s4
  %s7 = scalar_select 0, %s6, %s4
  $region1: #{tpu_custom_call.1} parent=0
    #allocation2 [shape = 'u8[196608]{0}', space=vmem, size = 0x30000, scoped, tag = 'input window, operand 0']
    #allocation3 [shape = 's32[2]{0}', space=sflag, size = 0x8, scoped, tag = 'scoped memory for tpu_custom_call.1']
    #allocation4 [shape = 's32[2]{0}', space=sflag, size = 0x8, scoped, tag = 'scoped memory for tpu_custom_call.1']
    #allocation5 [shape = 'u8[524288]{0}', space=vmem, size = 0x80000, scoped, tag = 'input window, operand 1, single buffered']
    #allocation6 [shape = 's32[1]{0}', space=sflag, size = 0x4, scoped, tag = 'scoped memory for tpu_custom_call.1']
    #allocation7 [shape = 'u8[4096]{0}', space=vmem, size = 0x1000, scoped, tag = 'input window, operand 2, single buffered']
    #allocation8 [shape = 'u8[786432]{0}', space=vmem, size = 0xc0000, scoped, tag = 'output window, operand 0']
    %8 = vsyncpa [#allocation3], 0
    %s9 = scalar_lea.sflag [#allocation3], 1
    %10 = vsyncpa %s9, 0
    %11 = vsyncpa [#allocation6], 0
    %12 = vsyncpa [#allocation4], 0
    %s13 = scalar_lea.sflag [#allocation4], 1
    %14 = vsyncpa %s13, 0
    loop: start=0, step=1, limit=6
    $region2: #{tpu_custom_call.1} parent=1 // loop_pre_header
      _
    $region3: #{tpu_custom_call.1} parent=1 // loop_header
      %s16 = sphi 0, %s20
      %p17 = scmp.ge.s32.totalorder %s16, 6
      %s26 = sphi 0, %s28
      %s29 = sphi 0, %s26
      %s30 = sphi 0, %s29
      %s46 = sphi 0, %s30
      %s50 = sphi 0, %s50
      %s52 = sphi 0, %s50
      %s53 = sphi 0, %s52
      %s67 = sphi 0, %s53
      %s71 = sphi 0, %s71
      %s73 = sphi 0, %s71
      %s74 = sphi 0, %s73
      %s88 = sphi 0, %s74
      %s94 = sphi 0, %s96
      %s97 = sphi 0, %s94
      %s98 = sphi 0, %s97
      %s114 = sphi 0, %s98
    $region4: #{tpu_custom_call.1} parent=1 // loop_header_branch
      %19 = sbr.rel (%p17) target = $region8
    $region5: #{tpu_custom_call.1} parent=1 // loop_body
      %s21 = ssub.s32 %s16, 1
      %s22 = ssub.s32 %s16, 2
      %s23 = sadd.s32 %s16, 1
      %s24 = ssub.s32 %s16, %s23
      %p25 = scmp.eq.s32.totalorder %s24, 0
      %s27 = sadd.s32 %s26, 1
      %s28 = scalar_select %p25, %s26, %s27
      %p31 = pneg %p25
      %p32 = scmp.eq.s32.totalorder %s16, 3
      %p33 = por %p31, %p32
      %p34 = scmp.ne.s32.totalorder %s26, %s29
      %p35 = scmp.eq.s32.totalorder %s16, 0
      %p36 = por %p34, %p35
      %p37 = scmp.ne.s32.totalorder %s26, %s29
      %p38 = scmp.eq.s32.totalorder %s21, 3
      %p39 = por %p37, %p38
      %p40 = scmp.ne.s32.totalorder %s29, %s30
      %p41 = scmp.eq.s32.totalorder %s21, 0
      %p42 = por %p40, %p41
      %p43 = scmp.ne.s32.totalorder %s29, %s30
      %p44 = scmp.eq.s32.totalorder %s22, 3
      %p45 = por %p43, %p44
      %p47 = scmp.ne.s32.totalorder %s30, %s46
      %p48 = scmp.eq.s32.totalorder %s22, 0
      %p49 = por %p47, %p48
      %s51 = sadd.s32 %s50, 1
      %p54 = scmp.eq.s32.totalorder %s16, 3
      %p55 = scmp.ne.s32.totalorder %s50, %s52
      %p56 = scmp.eq.s32.totalorder %s16, 0
      %p57 = por %p55, %p56
      %p58 = scmp.ne.s32.totalorder %s50, %s52
      %p59 = scmp.eq.s32.totalorder %s21, 3
      %p60 = por %p58, %p59
      %p61 = scmp.ne.s32.totalorder %s52, %s53
      %p62 = scmp.eq.s32.totalorder %s21, 0
      %p63 = por %p61, %p62
      %p64 = scmp.ne.s32.totalorder %s52, %s53
      %p65 = scmp.eq.s32.totalorder %s22, 3
      %p66 = por %p64, %p65
      %p68 = scmp.ne.s32.totalorder %s53, %s67
      %p69 = scmp.eq.s32.totalorder %s22, 0
      %p70 = por %p68, %p69
      %s72 = sadd.s32 %s71, 1
      %p75 = scmp.eq.s32.totalorder %s16, 3
      %p76 = scmp.ne.s32.totalorder %s71, %s73
      %p77 = scmp.eq.s32.totalorder %s16, 0
      %p78 = por %p76, %p77
      %p79 = scmp.ne.s32.totalorder %s71, %s73
      %p80 = scmp.eq.s32.totalorder %s21, 3
      %p81 = por %p79, %p80
      %p82 = scmp.ne.s32.totalorder %s73, %s74
      %p83 = scmp.eq.s32.totalorder %s21, 0
      %p84 = por %p82, %p83
      %p85 = scmp.ne.s32.totalorder %s73, %s74
      %p86 = scmp.eq.s32.totalorder %s22, 3
      %p87 = por %p85, %p86
      %p89 = scmp.ne.s32.totalorder %s74, %s88
      %p90 = scmp.eq.s32.totalorder %s22, 0
      %p91 = por %p89, %p90
      %s92 = ssub.s32 %s16, %s23
      %p93 = scmp.eq.s32.totalorder %s92, 0
      %s95 = sadd.s32 %s94, 1
      %s96 = scalar_select %p93, %s94, %s95
      %p99 = pneg %p93
      %p100 = scmp.eq.s32.totalorder %s16, 3
      %p101 = por %p99, %p100
      %p102 = scmp.ne.s32.totalorder %s94, %s97
      %p103 = scmp.eq.s32.totalorder %s16, 0
      %p104 = por %p102, %p103
      %p105 = scmp.ne.s32.totalorder %s94, %s97
      %p106 = scmp.eq.s32.totalorder %s21, 3
      %p107 = por %p105, %p106
      %p108 = scmp.ne.s32.totalorder %s97, %s98
      %p109 = scmp.eq.s32.totalorder %s21, 0
      %p110 = por %p108, %p109
      %p111 = scmp.ne.s32.totalorder %s97, %s98
      %p112 = scmp.eq.s32.totalorder %s22, 3
      %p113 = por %p111, %p112
      %p115 = scmp.ne.s32.totalorder %s98, %s114
      %p116 = scmp.eq.s32.totalorder %s22, 0
      %p117 = por %p115, %p116
      %p118 = scmp.le.s32.totalorder 1, %s16
      %p119 = scmp.lt.s32.totalorder %s16, 5
      %p120 = pnand %p118, %p119
      %p121 = pneg %p120
      // Predicated region
      $region9: #{tpu_custom_call.1} parent=5 // pred_check
        _
      $region10: #{tpu_custom_call.1} parent=5 // pred_check_branch
        %123 = sbr.rel (%p120) target = $region12
      $region11: #{tpu_custom_call.1} parent=5 // pred_region
        %s124 = ssub.s32 %s16, 1
        // Predicated region
        $region13: #{tpu_custom_call.1} parent=11 // pred_check
          %p125 = pneg %p63
        $region14: #{tpu_custom_call.1} parent=11 // pred_check_branch
          %127 = sbr.rel (%p125) target = $region16
        $region15: #{tpu_custom_call.1} parent=11 // pred_region
          %s129 = ssub.s32 16384, 16384
          %130 = vsyncadd [#allocation6], %s129
          %s131 = sshll.u32 [#allocation5], 4
          %s132 = int_to_ptr.vmem [resolvable:$true] %s131
          %137 = dma.hbm_to_vmem [thread:$0]  %s1, 16384, %s132, [#allocation6], 512, 512, 32
        $region16: #{tpu_custom_call.1} parent=11 // pred_fallthru
          _
        // Predicated region
        $region17: #{tpu_custom_call.1} parent=11 // pred_check
          %p138 = pneg %p84
        $region18: #{tpu_custom_call.1} parent=11 // pred_check_branch
          %140 = sbr.rel (%p138) target = $region20
        $region19: #{tpu_custom_call.1} parent=11 // pred_region
          %s142 = ssub.s32 128, 128
          %143 = vsyncadd [#allocation6], %s142
          %s145 = sshll.u32 [#allocation7], 4
          %s146 = int_to_ptr.vmem [resolvable:$true] %s145
          %148 = dma.hbm_to_vmem [thread:$0]  %s2, 128, %s146, [#allocation6]
        $region20: #{tpu_custom_call.1} parent=11 // pred_fallthru
          _
      $region12: #{tpu_custom_call.1} parent=5 // pred_fallthru
        _
      %p149 = scmp.lt.s32.totalorder %s16, 4
      // Predicated region
      $region21: #{tpu_custom_call.1} parent=5 // pred_check
        %p150 = pneg %p149
      $region22: #{tpu_custom_call.1} parent=5 // pred_check_branch
        %152 = sbr.rel (%p150) target = $region24
      $region23: #{tpu_custom_call.1} parent=5 // pred_region
        // Predicated region
        $region25: #{tpu_custom_call.1} parent=23 // pred_check
          %p153 = pneg %p36
        $region26: #{tpu_custom_call.1} parent=23 // pred_check_branch
          %155 = sbr.rel (%p153) target = $region28
        $region27: #{tpu_custom_call.1} parent=23 // pred_region
          %s156 = sand.u32 %s26, 1
          %s157 = scalar_lea.sflag [#allocation3], %s156
          %s158 = sand.u32 %s26, 1
          %s159 = smul.addr %s158, 192
          %s160 = scalar_lea.vmem [#allocation2], %s159
          %s161 = smul.u32 12, %s16
          %s163 = ssub.s32 3072, 3072
          %164 = vsyncadd %s157, %s163
          %s165 = smul.addr %s161, 2
          %s166 = smul.addr %s165, 128
          %s167 = scalar_lea.hbm %s0, %s166
          %s168 = sshll.u32 %s160, 4
          %s169 = int_to_ptr.vmem [resolvable:$true] %s168
          %174 = dma.hbm_to_vmem [thread:$0]  %s167, 3072, %s169, %s157, 256, 256, 16
        $region28: #{tpu_custom_call.1} parent=23 // pred_fallthru
          _
      $region24: #{tpu_custom_call.1} parent=5 // pred_fallthru
        _
      %p175 = scmp.le.s32.totalorder 1, %s16
      %p176 = scmp.lt.s32.totalorder %s16, 5
      %p177 = pnand %p175, %p176
      %p178 = pneg %p177
      // Predicated region
      $region29: #{tpu_custom_call.1} parent=5 // pred_check
        _
      $region30: #{tpu_custom_call.1} parent=5 // pred_check_branch
        %180 = sbr.rel (%p177) target = $region32
      $region31: #{tpu_custom_call.1} parent=5 // pred_region
        %s181 = ssub.s32 %s16, 1
        %s182 = sand.u32 %s29, 1
        %s183 = scalar_lea.sflag [#allocation3], %s182
        %s184 = sand.u32 %s29, 1
        %s185 = smul.addr %s184, 192
        %s186 = scalar_lea.vmem [#allocation2], %s185
        // Predicated region
        $region33: #{tpu_custom_call.1} parent=31 // pred_check
          %p187 = pneg %p42
        $region34: #{tpu_custom_call.1} parent=31 // pred_check_branch
          %189 = sbr.rel (%p187) target = $region36
        $region35: #{tpu_custom_call.1} parent=31 // pred_region
          %190 = dma.done %s183, 3072
        $region36: #{tpu_custom_call.1} parent=31 // pred_fallthru
          _
        // Predicated region
        $region37: #{tpu_custom_call.1} parent=31 // pred_check
          %p191 = pneg %p63
        $region38: #{tpu_custom_call.1} parent=31 // pred_check_branch
          %193 = sbr.rel (%p191) target = $region40
        $region39: #{tpu_custom_call.1} parent=31 // pred_region
          %194 = dma.done [#allocation6], 16384
        $region40: #{tpu_custom_call.1} parent=31 // pred_fallthru
          _
        // Predicated region
        $region41: #{tpu_custom_call.1} parent=31 // pred_check
          %p195 = pneg %p84
        $region42: #{tpu_custom_call.1} parent=31 // pred_check_branch
          %197 = sbr.rel (%p195) target = $region44
        $region43: #{tpu_custom_call.1} parent=31 // pred_region
          %198 = dma.done [#allocation6], 128
        $region44: #{tpu_custom_call.1} parent=31 // pred_fallthru
          _
        %s199 = sand.u32 %s29, 1
        %s200 = scalar_lea.sflag [#allocation3], %s199
        %s201 = sand.u32 %s29, 1
        %s202 = smul.addr %s201, 192
        %s203 = scalar_lea.vmem [#allocation2], %s202
        %p204 = pneg %p42
        %p205 = pneg %p39
        %p206 = pneg %p63
        %p207 = pneg %p60
        %p208 = pneg %p84
        %p209 = pneg %p81
        %p210 = pneg %p110
        %p211 = pneg %p107
        %s212 = sand.u32 %s97, 1
        %s213 = scalar_lea.sflag [#allocation4], %s212
        %s214 = sand.u32 %s97, 1
        %s215 = smul.addr %s214, 768
        %s216 = scalar_lea.vmem [#allocation8], %s215
        %s217 = smul.u32 12, %s21
        %s218 = smul.u32 12, %s21
        %v219 = vld [vmem:[%s186] sm:$0xff]
        %v220 = vld [vmem:[%s186 + $0x8] sm:$0xff]
        %v221 = vld [vmem:[%s186 + $0x10] sm:$0xff]
        %v222 = vld [vmem:[%s186 + $0x18] sm:$0xff]
        %v223 = vld [vmem:[%s186 + $0x20] sm:$0xff]
        %v224 = vld [vmem:[%s186 + $0x28] sm:$0xff]
        %v225 = vld [vmem:[%s186 + $0x30] sm:$0xff]
        %v226 = vld [vmem:[%s186 + $0x38] sm:$0xff]
        %v227 = vld [vmem:[%s186 + $0x40] sm:$0xff]
        %v228 = vld [vmem:[%s186 + $0x48] sm:$0xff]
        %v229 = vld [vmem:[%s186 + $0x50] sm:$0xff]
        %v230 = vld [vmem:[%s186 + $0x58] sm:$0xff]
        %v231 = vld [vmem:[%s186 + $0x60] sm:$0xff]
        %v232 = vld [vmem:[%s186 + $0x68] sm:$0xff]
        %v233 = vld [vmem:[%s186 + $0x70] sm:$0xff]
        %v234 = vld [vmem:[%s186 + $0x78] sm:$0xff]
        %v235 = vld [vmem:[%s186 + $0x80] sm:$0xff]
        %v236 = vld [vmem:[%s186 + $0x88] sm:$0xff]
        %v237 = vld [vmem:[%s186 + $0x90] sm:$0xff]
        %v238 = vld [vmem:[%s186 + $0x98] sm:$0xff]
        %v239 = vld [vmem:[%s186 + $0xa0] sm:$0xff]
        %v240 = vld [vmem:[%s186 + $0xa8] sm:$0xff]
        %v241 = vld [vmem:[%s186 + $0xb0] sm:$0xff]
        %v242 = vld [vmem:[%s186 + $0xb8] sm:$0xff]
        %v243 = vadd.f32 %v219, %v220
        %244 = vadd.xlane.f32.xlu0 %v243
        %v245 = vpop.xlane.xlu0 %244
        %v246 = vadd.f32 %v221, %v222
        %247 = vadd.xlane.f32.xlu0 %v246
        %v248 = vpop.xlane.xlu0 %247
        %v249 = vadd.f32 %v223, %v224
        %250 = vadd.xlane.f32.xlu0 %v249
        %v251 = vpop.xlane.xlu0 %250
        %v252 = vadd.f32 %v225, %v226
        %253 = vadd.xlane.f32.xlu0 %v252
        %v254 = vpop.xlane.xlu0 %253
        %v255 = vadd.f32 %v227, %v228
        %256 = vadd.xlane.f32.xlu0 %v255
        %v257 = vpop.xlane.xlu0 %256
        %v258 = vadd.f32 %v229, %v230
        %259 = vadd.xlane.f32.xlu0 %v258
        %v260 = vpop.xlane.xlu0 %259
        %v261 = vadd.f32 %v231, %v232
        %262 = vadd.xlane.f32.xlu0 %v261
        %v263 = vpop.xlane.xlu0 %262
        %v264 = vadd.f32 %v233, %v234
        %265 = vadd.xlane.f32.xlu0 %v264
        %v266 = vpop.xlane.xlu0 %265
        %v267 = vadd.f32 %v235, %v236
        %268 = vadd.xlane.f32.xlu0 %v267
        %v269 = vpop.xlane.xlu0 %268
        %v270 = vadd.f32 %v237, %v238
        %271 = vadd.xlane.f32.xlu0 %v270
        %v272 = vpop.xlane.xlu0 %271
        %v273 = vadd.f32 %v239, %v240
        %274 = vadd.xlane.f32.xlu0 %v273
        %v275 = vpop.xlane.xlu0 %274
        %v276 = vadd.f32 %v241, %v242
        %277 = vadd.xlane.f32.xlu0 %v276
        %v278 = vpop.xlane.xlu0 %277
        %v279 = vmul.f32 %v219, %v219
        %v280 = vmul.f32 %v220, %v220
        %v281 = vmul.f32 %v221, %v221
        %v282 = vmul.f32 %v222, %v222
        %v283 = vmul.f32 %v223, %v223
        %v284 = vmul.f32 %v224, %v224
        %v285 = vmul.f32 %v225, %v225
        %v286 = vmul.f32 %v226, %v226
        %v287 = vmul.f32 %v227, %v227
        %v288 = vmul.f32 %v228, %v228
        %v289 = vmul.f32 %v229, %v229
        %v290 = vmul.f32 %v230, %v230
        %v291 = vmul.f32 %v231, %v231
        %v292 = vmul.f32 %v232, %v232
        %v293 = vmul.f32 %v233, %v233
        %v294 = vmul.f32 %v234, %v234
        %v295 = vmul.f32 %v235, %v235
        %v296 = vmul.f32 %v236, %v236
        %v297 = vmul.f32 %v237, %v237
        %v298 = vmul.f32 %v238, %v238
        %v299 = vmul.f32 %v239, %v239
        %v300 = vmul.f32 %v240, %v240
        %v301 = vmul.f32 %v241, %v241
        %v302 = vmul.f32 %v242, %v242
        %v303 = vadd.f32 %v279, %v280
        %304 = vadd.xlane.f32.xlu0 %v303
        %v305 = vpop.xlane.xlu0 %304
        %v306 = vadd.f32 %v281, %v282
        %307 = vadd.xlane.f32.xlu0 %v306
        %v308 = vpop.xlane.xlu0 %307
        %v309 = vadd.f32 %v283, %v284
        %310 = vadd.xlane.f32.xlu0 %v309
        %v311 = vpop.xlane.xlu0 %310
        %v312 = vadd.f32 %v285, %v286
        %313 = vadd.xlane.f32.xlu0 %v312
        %v314 = vpop.xlane.xlu0 %313
        %v315 = vadd.f32 %v287, %v288
        %316 = vadd.xlane.f32.xlu0 %v315
        %v317 = vpop.xlane.xlu0 %316
        %v318 = vadd.f32 %v289, %v290
        %319 = vadd.xlane.f32.xlu0 %v318
        %v320 = vpop.xlane.xlu0 %319
        %v321 = vadd.f32 %v291, %v292
        %322 = vadd.xlane.f32.xlu0 %v321
        %v323 = vpop.xlane.xlu0 %322
        %v324 = vadd.f32 %v293, %v294
        %325 = vadd.xlane.f32.xlu0 %v324
        %v326 = vpop.xlane.xlu0 %325
        %v327 = vadd.f32 %v295, %v296
        %328 = vadd.xlane.f32.xlu0 %v327
        %v329 = vpop.xlane.xlu0 %328
        %v330 = vadd.f32 %v297, %v298
        %331 = vadd.xlane.f32.xlu0 %v330
        %v332 = vpop.xlane.xlu0 %331
        %v333 = vadd.f32 %v299, %v300
        %334 = vadd.xlane.f32.xlu0 %v333
        %v335 = vpop.xlane.xlu0 %334
        %v336 = vadd.f32 %v301, %v302
        %337 = vadd.xlane.f32.xlu0 %v336
        %v338 = vpop.xlane.xlu0 %337
        %v339 = vmul.f32 %v245, 0.00390625
        %v340 = vmul.f32 %v248, 0.00390625
        %v341 = vmul.f32 %v251, 0.00390625
        %v342 = vmul.f32 %v254, 0.00390625
        %v343 = vmul.f32 %v257, 0.00390625
        %v344 = vmul.f32 %v260, 0.00390625
        %v345 = vmul.f32 %v263, 0.00390625
        %v346 = vmul.f32 %v266, 0.00390625
        %v347 = vmul.f32 %v269, 0.00390625
        %v348 = vmul.f32 %v272, 0.00390625
        %v349 = vmul.f32 %v275, 0.00390625
        %v350 = vmul.f32 %v278, 0.00390625
        %v351 = vmul.f32 %v305, 0.00390625
        %v352 = vmul.f32 %v308, 0.00390625
        %v353 = vmul.f32 %v311, 0.00390625
        %v354 = vmul.f32 %v314, 0.00390625
        %v355 = vmul.f32 %v317, 0.00390625
        %v356 = vmul.f32 %v320, 0.00390625
        %v357 = vmul.f32 %v323, 0.00390625
        %v358 = vmul.f32 %v326, 0.00390625
        %v359 = vmul.f32 %v329, 0.00390625
        %v360 = vmul.f32 %v332, 0.00390625
        %v361 = vmul.f32 %v335, 0.00390625
        %v362 = vmul.f32 %v338, 0.00390625
        %v363 = vmul.f32 %v339, %v339
        %v364 = vmul.f32 %v340, %v340
        %v365 = vmul.f32 %v341, %v341
        %v366 = vmul.f32 %v342, %v342
        %v367 = vmul.f32 %v343, %v343
        %v368 = vmul.f32 %v344, %v344
        %v369 = vmul.f32 %v345, %v345
        %v370 = vmul.f32 %v346, %v346
        %v371 = vmul.f32 %v347, %v347
        %v372 = vmul.f32 %v348, %v348
        %v373 = vmul.f32 %v349, %v349
        %v374 = vmul.f32 %v350, %v350
        %v375 = vsub.f32 %v351, %v363
        %v376 = vsub.f32 %v352, %v364
        %v377 = vsub.f32 %v353, %v365
        %v378 = vsub.f32 %v354, %v366
        %v379 = vsub.f32 %v355, %v367
        %v380 = vsub.f32 %v356, %v368
        %v381 = vsub.f32 %v357, %v369
        %v382 = vsub.f32 %v358, %v370
        %v383 = vsub.f32 %v359, %v371
        %v384 = vsub.f32 %v360, %v372
        %v385 = vsub.f32 %v361, %v373
        %v386 = vsub.f32 %v362, %v374
        %v387 = vmax.f32 %v375, 0.0
        %v388 = vmax.f32 %v376, 0.0
        %v389 = vmax.f32 %v377, 0.0
        %v390 = vmax.f32 %v378, 0.0
        %v391 = vmax.f32 %v379, 0.0
        %v392 = vmax.f32 %v380, 0.0
        %v393 = vmax.f32 %v381, 0.0
        %v394 = vmax.f32 %v382, 0.0
        %v395 = vmax.f32 %v383, 0.0
        %v396 = vmax.f32 %v384, 0.0
        %v397 = vmax.f32 %v385, 0.0
        %v398 = vmax.f32 %v386, 0.0
        %v399 = vsub.f32 %v219, %v339
        %v400 = vsub.f32 %v220, %v339
        %v401 = vsub.f32 %v221, %v340
        %v402 = vsub.f32 %v222, %v340
        %v403 = vsub.f32 %v223, %v341
        %v404 = vsub.f32 %v224, %v341
        %v405 = vsub.f32 %v225, %v342
        %v406 = vsub.f32 %v226, %v342
        %v407 = vsub.f32 %v227, %v343
        %v408 = vsub.f32 %v228, %v343
        %v409 = vsub.f32 %v229, %v344
        %v410 = vsub.f32 %v230, %v344
        %v411 = vsub.f32 %v231, %v345
        %v412 = vsub.f32 %v232, %v345
        %v413 = vsub.f32 %v233, %v346
        %v414 = vsub.f32 %v234, %v346
        %v415 = vsub.f32 %v235, %v347
        %v416 = vsub.f32 %v236, %v347
        %v417 = vsub.f32 %v237, %v348
        %v418 = vsub.f32 %v238, %v348
        %v419 = vsub.f32 %v239, %v349
        %v420 = vsub.f32 %v240, %v349
        %v421 = vsub.f32 %v241, %v350
        %v422 = vsub.f32 %v242, %v350
        %v423 = vadd.f32 %v387, 1e-12
        %v424 = vadd.f32 %v388, 1e-12
        %v425 = vadd.f32 %v389, 1e-12
        %v426 = vadd.f32 %v390, 1e-12
        %v427 = vadd.f32 %v391, 1e-12
        %v428 = vadd.f32 %v392, 1e-12
        %v429 = vadd.f32 %v393, 1e-12
        %v430 = vadd.f32 %v394, 1e-12
        %v431 = vadd.f32 %v395, 1e-12
        %v432 = vadd.f32 %v396, 1e-12
        %v433 = vadd.f32 %v397, 1e-12
        %v434 = vadd.f32 %v398, 1e-12
        %v435 = vrsqrt.pop %v423
        %v436 = vrsqrt.pop %v424
        %v437 = vrsqrt.pop %v425
        %v438 = vrsqrt.pop %v426
        %v439 = vrsqrt.pop %v427
        %v440 = vrsqrt.pop %v428
        %v441 = vrsqrt.pop %v429
        %v442 = vrsqrt.pop %v430
        %v443 = vrsqrt.pop %v431
        %v444 = vrsqrt.pop %v432
        %v445 = vrsqrt.pop %v433
        %v446 = vrsqrt.pop %v434
        %v447 = vmul.f32 %v399, %v435
        %v448 = vmul.f32 %v400, %v435
        %v449 = vmul.f32 %v401, %v436
        %v450 = vmul.f32 %v402, %v436
        %v451 = vmul.f32 %v403, %v437
        %v452 = vmul.f32 %v404, %v437
        %v453 = vmul.f32 %v405, %v438
        %v454 = vmul.f32 %v406, %v438
        %v455 = vmul.f32 %v407, %v439
        %v456 = vmul.f32 %v408, %v439
        %v457 = vmul.f32 %v409, %v440
        %v458 = vmul.f32 %v410, %v440
        %v459 = vmul.f32 %v411, %v441
        %v460 = vmul.f32 %v412, %v441
        %v461 = vmul.f32 %v413, %v442
        %v462 = vmul.f32 %v414, %v442
        %v463 = vmul.f32 %v415, %v443
        %v464 = vmul.f32 %v416, %v443
        %v465 = vmul.f32 %v417, %v444
        %v466 = vmul.f32 %v418, %v444
        %v467 = vmul.f32 %v419, %v445
        %v468 = vmul.f32 %v420, %v445
        %v469 = vmul.f32 %v421, %v446
        %v470 = vmul.f32 %v422, %v446
        %v471 = vpack.c.bf16 %v449, %v447
        %v472 = vpack.c.bf16 %v450, %v448
        %v473 = vpack.c.bf16 %v453, %v451
        %v474 = vpack.c.bf16 %v454, %v452
        %v475 = vpack.c.bf16 %v457, %v455
        %v476 = vpack.c.bf16 %v458, %v456
        %v477 = vpack.c.bf16 %v461, %v459
        %v478 = vpack.c.bf16 %v462, %v460
        %v479 = vpack.c.bf16 %v465, %v463
        %v480 = vpack.c.bf16 %v466, %v464
        %v481 = vpack.c.bf16 %v469, %v467
        %v482 = vpack.c.bf16 %v470, %v468
        %v483 = vld [vmem:[#allocation5] sm:$0xff]
        %v484 = vld [vmem:[#allocation5 + $0x8] sm:$0xff]
        %v485 = vld [vmem:[#allocation5 + $0x10] sm:$0xff]
        %v486 = vld [vmem:[#allocation5 + $0x18] sm:$0xff]
        %v487 = vld [vmem:[#allocation5 + $0x20] sm:$0xff]
        %v488 = vld [vmem:[#allocation5 + $0x28] sm:$0xff]
        %v489 = vld [vmem:[#allocation5 + $0x30] sm:$0xff]
        %v490 = vld [vmem:[#allocation5 + $0x38] sm:$0xff]
        %v491 = vld [vmem:[#allocation5 + $0x40] sm:$0xff]
        %v492 = vld [vmem:[#allocation5 + $0x48] sm:$0xff]
        %v493 = vld [vmem:[#allocation5 + $0x50] sm:$0xff]
        %v494 = vld [vmem:[#allocation5 + $0x58] sm:$0xff]
        %v495 = vld [vmem:[#allocation5 + $0x60] sm:$0xff]
        %v496 = vld [vmem:[#allocation5 + $0x68] sm:$0xff]
        %v497 = vld [vmem:[#allocation5 + $0x70] sm:$0xff]
        %v498 = vld [vmem:[#allocation5 + $0x78] sm:$0xff]
        %v499 = vld [vmem:[#allocation5 + $0x80] sm:$0xff]
        %v500 = vld [vmem:[#allocation5 + $0x88] sm:$0xff]
        %v501 = vld [vmem:[#allocation5 + $0x90] sm:$0xff]
        %v502 = vld [vmem:[#allocation5 + $0x98] sm:$0xff]
        %v503 = vld [vmem:[#allocation5 + $0xa0] sm:$0xff]
        %v504 = vld [vmem:[#allocation5 + $0xa8] sm:$0xff]
        %v505 = vld [vmem:[#allocation5 + $0xb0] sm:$0xff]
        %v506 = vld [vmem:[#allocation5 + $0xb8] sm:$0xff]
        %v507 = vld [vmem:[#allocation5 + $0xc0] sm:$0xff]
        %v508 = vld [vmem:[#allocation5 + $0xc8] sm:$0xff]
        %v509 = vld [vmem:[#allocation5 + $0xd0] sm:$0xff]
        %v510 = vld [vmem:[#allocation5 + $0xd8] sm:$0xff]
        %v511 = vld [vmem:[#allocation5 + $0xe0] sm:$0xff]
        %v512 = vld [vmem:[#allocation5 + $0xe8] sm:$0xff]
        %v513 = vld [vmem:[#allocation5 + $0xf0] sm:$0xff]
        %v514 = vld [vmem:[#allocation5 + $0xf8] sm:$0xff]
        %v515 = vld [vmem:[#allocation5 + $0x100] sm:$0xff]
        %v516 = vld [vmem:[#allocation5 + $0x108] sm:$0xff]
        %v517 = vld [vmem:[#allocation5 + $0x110] sm:$0xff]
        %v518 = vld [vmem:[#allocation5 + $0x118] sm:$0xff]
        %v519 = vld [vmem:[#allocation5 + $0x120] sm:$0xff]
        %v520 = vld [vmem:[#allocation5 + $0x128] sm:$0xff]
        %v521 = vld [vmem:[#allocation5 + $0x130] sm:$0xff]
        %v522 = vld [vmem:[#allocation5 + $0x138] sm:$0xff]
        %v523 = vld [vmem:[#allocation5 + $0x140] sm:$0xff]
        %v524 = vld [vmem:[#allocation5 + $0x148] sm:$0xff]
        %v525 = vld [vmem:[#allocation5 + $0x150] sm:$0xff]
        %v526 = vld [vmem:[#allocation5 + $0x158] sm:$0xff]
        %v527 = vld [vmem:[#allocation5 + $0x160] sm:$0xff]
        %v528 = vld [vmem:[#allocation5 + $0x168] sm:$0xff]
        %v529 = vld [vmem:[#allocation5 + $0x170] sm:$0xff]
        %v530 = vld [vmem:[#allocation5 + $0x178] sm:$0xff]
        %v531 = vld [vmem:[#allocation5 + $0x180] sm:$0xff]
        %v532 = vld [vmem:[#allocation5 + $0x188] sm:$0xff]
        %v533 = vld [vmem:[#allocation5 + $0x190] sm:$0xff]
        %v534 = vld [vmem:[#allocation5 + $0x198] sm:$0xff]
        %v535 = vld [vmem:[#allocation5 + $0x1a0] sm:$0xff]
        %v536 = vld [vmem:[#allocation5 + $0x1a8] sm:$0xff]
        %v537 = vld [vmem:[#allocation5 + $0x1b0] sm:$0xff]
        %v538 = vld [vmem:[#allocation5 + $0x1b8] sm:$0xff]
        %v539 = vld [vmem:[#allocation5 + $0x1c0] sm:$0xff]
        %v540 = vld [vmem:[#allocation5 + $0x1c8] sm:$0xff]
        %v541 = vld [vmem:[#allocation5 + $0x1d0] sm:$0xff]
        %v542 = vld [vmem:[#allocation5 + $0x1d8] sm:$0xff]
        %v543 = vld [vmem:[#allocation5 + $0x1e0] sm:$0xff]
        %v544 = vld [vmem:[#allocation5 + $0x1e8] sm:$0xff]
        %v545 = vld [vmem:[#allocation5 + $0x1f0] sm:$0xff]
        %v546 = vld [vmem:[#allocation5 + $0x1f8] sm:$0xff]
        %v547 = vld [vmem:[#allocation5 + $0x200] sm:$0xff]
        %v548 = vld [vmem:[#allocation5 + $0x208] sm:$0xff]
        %v549 = vld [vmem:[#allocation5 + $0x210] sm:$0xff]
        %v550 = vld [vmem:[#allocation5 + $0x218] sm:$0xff]
        %v551 = vld [vmem:[#allocation5 + $0x220] sm:$0xff]
        %v552 = vld [vmem:[#allocation5 + $0x228] sm:$0xff]
        %v553 = vld [vmem:[#allocation5 + $0x230] sm:$0xff]
        %v554 = vld [vmem:[#allocation5 + $0x238] sm:$0xff]
        %v555 = vld [vmem:[#allocation5 + $0x240] sm:$0xff]
        %v556 = vld [vmem:[#allocation5 + $0x248] sm:$0xff]
        %v557 = vld [vmem:[#allocation5 + $0x250] sm:$0xff]
        %v558 = vld [vmem:[#allocation5 + $0x258] sm:$0xff]
        %v559 = vld [vmem:[#allocation5 + $0x260] sm:$0xff]
        %v560 = vld [vmem:[#allocation5 + $0x268] sm:$0xff]
        %v561 = vld [vmem:[#allocation5 + $0x270] sm:$0xff]
        %v562 = vld [vmem:[#allocation5 + $0x278] sm:$0xff]
        %v563 = vld [vmem:[#allocation5 + $0x280] sm:$0xff]
        %v564 = vld [vmem:[#allocation5 + $0x288] sm:$0xff]
        %v565 = vld [vmem:[#allocation5 + $0x290] sm:$0xff]
        %v566 = vld [vmem:[#allocation5 + $0x298] sm:$0xff]
        %v567 = vld [vmem:[#allocation5 + $0x2a0] sm:$0xff]
        %v568 = vld [vmem:[#allocation5 + $0x2a8] sm:$0xff]
        %v569 = vld [vmem:[#allocation5 + $0x2b0] sm:$0xff]
        %v570 = vld [vmem:[#allocation5 + $0x2b8] sm:$0xff]
        %v571 = vld [vmem:[#allocation5 + $0x2c0] sm:$0xff]
        %v572 = vld [vmem:[#allocation5 + $0x2c8] sm:$0xff]
        %v573 = vld [vmem:[#allocation5 + $0x2d0] sm:$0xff]
        %v574 = vld [vmem:[#allocation5 + $0x2d8] sm:$0xff]
        %v575 = vld [vmem:[#allocation5 + $0x2e0] sm:$0xff]
        %v576 = vld [vmem:[#allocation5 + $0x2e8] sm:$0xff]
        %v577 = vld [vmem:[#allocation5 + $0x2f0] sm:$0xff]
        %v578 = vld [vmem:[#allocation5 + $0x2f8] sm:$0xff]
        %v579 = vld [vmem:[#allocation5 + $0x300] sm:$0xff]
        %v580 = vld [vmem:[#allocation5 + $0x308] sm:$0xff]
        %v581 = vld [vmem:[#allocation5 + $0x310] sm:$0xff]
        %v582 = vld [vmem:[#allocation5 + $0x318] sm:$0xff]
        %v583 = vld [vmem:[#allocation5 + $0x320] sm:$0xff]
        %v584 = vld [vmem:[#allocation5 + $0x328] sm:$0xff]
        %v585 = vld [vmem:[#allocation5 + $0x330] sm:$0xff]
        %v586 = vld [vmem:[#allocation5 + $0x338] sm:$0xff]
        %v587 = vld [vmem:[#allocation5 + $0x340] sm:$0xff]
        %v588 = vld [vmem:[#allocation5 + $0x348] sm:$0xff]
        %v589 = vld [vmem:[#allocation5 + $0x350] sm:$0xff]
        %v590 = vld [vmem:[#allocation5 + $0x358] sm:$0xff]
        %v591 = vld [vmem:[#allocation5 + $0x360] sm:$0xff]
        %v592 = vld [vmem:[#allocation5 + $0x368] sm:$0xff]
        %v593 = vld [vmem:[#allocation5 + $0x370] sm:$0xff]
        %v594 = vld [vmem:[#allocation5 + $0x378] sm:$0xff]
        %v595 = vld [vmem:[#allocation5 + $0x380] sm:$0xff]
        %v596 = vld [vmem:[#allocation5 + $0x388] sm:$0xff]
        %v597 = vld [vmem:[#allocation5 + $0x390] sm:$0xff]
        %v598 = vld [vmem:[#allocation5 + $0x398] sm:$0xff]
        %v599 = vld [vmem:[#allocation5 + $0x3a0] sm:$0xff]
        %v600 = vld [vmem:[#allocation5 + $0x3a8] sm:$0xff]
        %v601 = vld [vmem:[#allocation5 + $0x3b0] sm:$0xff]
        %v602 = vld [vmem:[#allocation5 + $0x3b8] sm:$0xff]
        %v603 = vld [vmem:[#allocation5 + $0x3c0] sm:$0xff]
        %v604 = vld [vmem:[#allocation5 + $0x3c8] sm:$0xff]
        %v605 = vld [vmem:[#allocation5 + $0x3d0] sm:$0xff]
        %v606 = vld [vmem:[#allocation5 + $0x3d8] sm:$0xff]
        %v607 = vld [vmem:[#allocation5 + $0x3e0] sm:$0xff]
        %v608 = vld [vmem:[#allocation5 + $0x3e8] sm:$0xff]
        %v609 = vld [vmem:[#allocation5 + $0x3f0] sm:$0xff]
        %v610 = vld [vmem:[#allocation5 + $0x3f8] sm:$0xff]
        %v611 = vld [vmem:[#allocation7] sm:$0xff]
        %v613 = vlaneseq
        %v614 = vshrl.u32 %v613, 7
        %v615 = vsub.s32 0, %v614
        %v616 = vrot.slane %v611, %v615
        %v617 = vlaneseq
        %v618 = vshrl.u32 %v617, 7
        %v619 = vsub.s32 1, %v618
        %v620 = vrot.slane %v611, %v619
        %v621 = vlaneseq
        %v622 = vshrl.u32 %v621, 7
        %v623 = vsub.s32 2, %v622
        %v624 = vrot.slane %v611, %v623
        %v625 = vlaneseq
        %v626 = vshrl.u32 %v625, 7
        %v627 = vsub.s32 3, %v626
        %v628 = vrot.slane %v611, %v627
        %v629 = vlaneseq
        %v630 = vshrl.u32 %v629, 7
        %v631 = vsub.s32 4, %v630
        %v632 = vrot.slane %v611, %v631
        %v633 = vlaneseq
        %v634 = vshrl.u32 %v633, 7
        %v635 = vsub.s32 5, %v634
        %v636 = vrot.slane %v611, %v635
        %v637 = vlaneseq
        %v638 = vshrl.u32 %v637, 7
        %v639 = vsub.s32 6, %v638
        %v640 = vrot.slane %v611, %v639
        %v641 = vlaneseq
        %v642 = vshrl.u32 %v641, 7
        %v643 = vsub.s32 7, %v642
        %v644 = vrot.slane %v611, %v643
        %v781 = vunpack.c.l.b16 %v483
        %v782 = vunpack.c.h.b16 %v483
        %v783 = vunpack.c.l.b16 %v484
        %v784 = vunpack.c.h.b16 %v484
        %v785 = vunpack.c.l.b16 %v485
        %v786 = vunpack.c.h.b16 %v485
        %v787 = vunpack.c.l.b16 %v486
        %v788 = vunpack.c.h.b16 %v486
        %v789 = vunpack.c.l.b16 %v487
        %v790 = vunpack.c.h.b16 %v487
        %v791 = vunpack.c.l.b16 %v488
        %v792 = vunpack.c.h.b16 %v488
        %v793 = vunpack.c.l.b16 %v489
        %v794 = vunpack.c.h.b16 %v489
        %v795 = vunpack.c.l.b16 %v490
        %v796 = vunpack.c.h.b16 %v490
        %v797 = vunpack.c.l.b16 %v491
        %v798 = vunpack.c.h.b16 %v491
        %v799 = vunpack.c.l.b16 %v492
        %v800 = vunpack.c.h.b16 %v492
        %v801 = vunpack.c.l.b16 %v493
        %v802 = vunpack.c.h.b16 %v493
        %v803 = vunpack.c.l.b16 %v494
        %v804 = vunpack.c.h.b16 %v494
        %v805 = vunpack.c.l.b16 %v495
        %v806 = vunpack.c.h.b16 %v495
        %v807 = vunpack.c.l.b16 %v496
        %v808 = vunpack.c.h.b16 %v496
        %v809 = vunpack.c.l.b16 %v497
        %v810 = vunpack.c.h.b16 %v497
        %v811 = vunpack.c.l.b16 %v498
        %v812 = vunpack.c.h.b16 %v498
        %v813 = vunpack.c.l.b16 %v499
        %v814 = vunpack.c.h.b16 %v499
        %v815 = vunpack.c.l.b16 %v500
        %v816 = vunpack.c.h.b16 %v500
        %v817 = vunpack.c.l.b16 %v501
        %v818 = vunpack.c.h.b16 %v501
        %v819 = vunpack.c.l.b16 %v502
        %v820 = vunpack.c.h.b16 %v502
        %v821 = vunpack.c.l.b16 %v503
        %v822 = vunpack.c.h.b16 %v503
        %v823 = vunpack.c.l.b16 %v504
        %v824 = vunpack.c.h.b16 %v504
        %v825 = vunpack.c.l.b16 %v505
        %v826 = vunpack.c.h.b16 %v505
        %v827 = vunpack.c.l.b16 %v506
        %v828 = vunpack.c.h.b16 %v506
        %v829 = vunpack.c.l.b16 %v507
        %v830 = vunpack.c.h.b16 %v507
        %v831 = vunpack.c.l.b16 %v508
        %v832 = vunpack.c.h.b16 %v508
        %v833 = vunpack.c.l.b16 %v509
        %v834 = vunpack.c.h.b16 %v509
        %v835 = vunpack.c.l.b16 %v510
        %v836 = vunpack.c.h.b16 %v510
        %v837 = vunpack.c.l.b16 %v511
        %v838 = vunpack.c.h.b16 %v511
        %v839 = vunpack.c.l.b16 %v512
        %v840 = vunpack.c.h.b16 %v512
        %v841 = vunpack.c.l.b16 %v513
        %v842 = vunpack.c.h.b16 %v513
        %v843 = vunpack.c.l.b16 %v514
        %v844 = vunpack.c.h.b16 %v514
        %v845 = vunpack.c.l.b16 %v515
        %v846 = vunpack.c.h.b16 %v515
        %v847 = vunpack.c.l.b16 %v516
        %v848 = vunpack.c.h.b16 %v516
        %v849 = vunpack.c.l.b16 %v517
        %v850 = vunpack.c.h.b16 %v517
        %v851 = vunpack.c.l.b16 %v518
        %v852 = vunpack.c.h.b16 %v518
        %v853 = vunpack.c.l.b16 %v519
        %v854 = vunpack.c.h.b16 %v519
        %v855 = vunpack.c.l.b16 %v520
        %v856 = vunpack.c.h.b16 %v520
        %v857 = vunpack.c.l.b16 %v521
        %v858 = vunpack.c.h.b16 %v521
        %v859 = vunpack.c.l.b16 %v522
        %v860 = vunpack.c.h.b16 %v522
        %v861 = vunpack.c.l.b16 %v523
        %v862 = vunpack.c.h.b16 %v523
        %v863 = vunpack.c.l.b16 %v524
        %v864 = vunpack.c.h.b16 %v524
        %v865 = vunpack.c.l.b16 %v525
        %v866 = vunpack.c.h.b16 %v525
        %v867 = vunpack.c.l.b16 %v526
        %v868 = vunpack.c.h.b16 %v526
        %v869 = vunpack.c.l.b16 %v527
        %v870 = vunpack.c.h.b16 %v527
        %v871 = vunpack.c.l.b16 %v528
        %v872 = vunpack.c.h.b16 %v528
        %v873 = vunpack.c.l.b16 %v529
        %v874 = vunpack.c.h.b16 %v529
        %v875 = vunpack.c.l.b16 %v530
        %v876 = vunpack.c.h.b16 %v530
        %v877 = vunpack.c.l.b16 %v531
        %v878 = vunpack.c.h.b16 %v531
        %v879 = vunpack.c.l.b16 %v532
        %v880 = vunpack.c.h.b16 %v532
        %v881 = vunpack.c.l.b16 %v533
        %v882 = vunpack.c.h.b16 %v533
        %v883 = vunpack.c.l.b16 %v534
        %v884 = vunpack.c.h.b16 %v534
        %v885 = vunpack.c.l.b16 %v535
        %v886 = vunpack.c.h.b16 %v535
        %v887 = vunpack.c.l.b16 %v536
        %v888 = vunpack.c.h.b16 %v536
        %v889 = vunpack.c.l.b16 %v537
        %v890 = vunpack.c.h.b16 %v537
        %v891 = vunpack.c.l.b16 %v538
        %v892 = vunpack.c.h.b16 %v538
        %v893 = vunpack.c.l.b16 %v539
        %v894 = vunpack.c.h.b16 %v539
        %v895 = vunpack.c.l.b16 %v540
        %v896 = vunpack.c.h.b16 %v540
        %v897 = vunpack.c.l.b16 %v541
        %v898 = vunpack.c.h.b16 %v541
        %v899 = vunpack.c.l.b16 %v542
        %v900 = vunpack.c.h.b16 %v542
        %v901 = vunpack.c.l.b16 %v543
        %v902 = vunpack.c.h.b16 %v543
        %v903 = vunpack.c.l.b16 %v544
        %v904 = vunpack.c.h.b16 %v544
        %v905 = vunpack.c.l.b16 %v545
        %v906 = vunpack.c.h.b16 %v545
        %v907 = vunpack.c.l.b16 %v546
        %v908 = vunpack.c.h.b16 %v546
        %v909 = vunpack.c.l.b16 %v547
        %v910 = vunpack.c.h.b16 %v547
        %v911 = vunpack.c.l.b16 %v548
        %v912 = vunpack.c.h.b16 %v548
        %v913 = vunpack.c.l.b16 %v549
        %v914 = vunpack.c.h.b16 %v549
        %v915 = vunpack.c.l.b16 %v550
        %v916 = vunpack.c.h.b16 %v550
        %v917 = vunpack.c.l.b16 %v551
        %v918 = vunpack.c.h.b16 %v551
        %v919 = vunpack.c.l.b16 %v552
        %v920 = vunpack.c.h.b16 %v552
        %v921 = vunpack.c.l.b16 %v553
        %v922 = vunpack.c.h.b16 %v553
        %v923 = vunpack.c.l.b16 %v554
        %v924 = vunpack.c.h.b16 %v554
        %v925 = vunpack.c.l.b16 %v555
        %v926 = vunpack.c.h.b16 %v555
        %v927 = vunpack.c.l.b16 %v556
        %v928 = vunpack.c.h.b16 %v556
        %v929 = vunpack.c.l.b16 %v557
        %v930 = vunpack.c.h.b16 %v557
        %v931 = vunpack.c.l.b16 %v558
        %v932 = vunpack.c.h.b16 %v558
        %v933 = vunpack.c.l.b16 %v559
        %v934 = vunpack.c.h.b16 %v559
        %v935 = vunpack.c.l.b16 %v560
        %v936 = vunpack.c.h.b16 %v560
        %v937 = vunpack.c.l.b16 %v561
        %v938 = vunpack.c.h.b16 %v561
        %v939 = vunpack.c.l.b16 %v562
        %v940 = vunpack.c.h.b16 %v562
        %v941 = vunpack.c.l.b16 %v563
        %v942 = vunpack.c.h.b16 %v563
        %v943 = vunpack.c.l.b16 %v564
        %v944 = vunpack.c.h.b16 %v564
        %v945 = vunpack.c.l.b16 %v565
        %v946 = vunpack.c.h.b16 %v565
        %v947 = vunpack.c.l.b16 %v566
        %v948 = vunpack.c.h.b16 %v566
        %v949 = vunpack.c.l.b16 %v567
        %v950 = vunpack.c.h.b16 %v567
        %v951 = vunpack.c.l.b16 %v568
        %v952 = vunpack.c.h.b16 %v568
        %v953 = vunpack.c.l.b16 %v569
        %v954 = vunpack.c.h.b16 %v569
        %v955 = vunpack.c.l.b16 %v570
        %v956 = vunpack.c.h.b16 %v570
        %v957 = vunpack.c.l.b16 %v571
        %v958 = vunpack.c.h.b16 %v571
        %v959 = vunpack.c.l.b16 %v572
        %v960 = vunpack.c.h.b16 %v572
        %v961 = vunpack.c.l.b16 %v573
        %v962 = vunpack.c.h.b16 %v573
        %v963 = vunpack.c.l.b16 %v574
        %v964 = vunpack.c.h.b16 %v574
        %v965 = vunpack.c.l.b16 %v575
        %v966 = vunpack.c.h.b16 %v575
        %v967 = vunpack.c.l.b16 %v576
        %v968 = vunpack.c.h.b16 %v576
        %v969 = vunpack.c.l.b16 %v577
        %v970 = vunpack.c.h.b16 %v577
        %v971 = vunpack.c.l.b16 %v578
        %v972 = vunpack.c.h.b16 %v578
        %v973 = vunpack.c.l.b16 %v579
        %v974 = vunpack.c.h.b16 %v579
        %v975 = vunpack.c.l.b16 %v580
        %v976 = vunpack.c.h.b16 %v580
        %v977 = vunpack.c.l.b16 %v581
        %v978 = vunpack.c.h.b16 %v581
        %v979 = vunpack.c.l.b16 %v582
        %v980 = vunpack.c.h.b16 %v582
        %v981 = vunpack.c.l.b16 %v583
        %v982 = vunpack.c.h.b16 %v583
        %v983 = vunpack.c.l.b16 %v584
        %v984 = vunpack.c.h.b16 %v584
        %v985 = vunpack.c.l.b16 %v585
        %v986 = vunpack.c.h.b16 %v585
        %v987 = vunpack.c.l.b16 %v586
        %v988 = vunpack.c.h.b16 %v586
        %v989 = vunpack.c.l.b16 %v587
        %v990 = vunpack.c.h.b16 %v587
        %v991 = vunpack.c.l.b16 %v588
        %v992 = vunpack.c.h.b16 %v588
        %v993 = vunpack.c.l.b16 %v589
        %v994 = vunpack.c.h.b16 %v589
        %v995 = vunpack.c.l.b16 %v590
        %v996 = vunpack.c.h.b16 %v590
        %v997 = vunpack.c.l.b16 %v591
        %v998 = vunpack.c.h.b16 %v591
        %v999 = vunpack.c.l.b16 %v592
        %v1000 = vunpack.c.h.b16 %v592
        %v1001 = vunpack.c.l.b16 %v593
        %v1002 = vunpack.c.h.b16 %v593
        %v1003 = vunpack.c.l.b16 %v594
        %v1004 = vunpack.c.h.b16 %v594
        %v1005 = vunpack.c.l.b16 %v595
        %v1006 = vunpack.c.h.b16 %v595
        %v1007 = vunpack.c.l.b16 %v596
        %v1008 = vunpack.c.h.b16 %v596
        %v1009 = vunpack.c.l.b16 %v597
        %v1010 = vunpack.c.h.b16 %v597
        %v1011 = vunpack.c.l.b16 %v598
        %v1012 = vunpack.c.h.b16 %v598
        %v1013 = vunpack.c.l.b16 %v599
        %v1014 = vunpack.c.h.b16 %v599
        %v1015 = vunpack.c.l.b16 %v600
        %v1016 = vunpack.c.h.b16 %v600
        %v1017 = vunpack.c.l.b16 %v601
        %v1018 = vunpack.c.h.b16 %v601
        %v1019 = vunpack.c.l.b16 %v602
        %v1020 = vunpack.c.h.b16 %v602
        %v1021 = vunpack.c.l.b16 %v603
        %v1022 = vunpack.c.h.b16 %v603
        %v1023 = vunpack.c.l.b16 %v604
        %v1024 = vunpack.c.h.b16 %v604
        %v1025 = vunpack.c.l.b16 %v605
        %v1026 = vunpack.c.h.b16 %v605
        %v1027 = vunpack.c.l.b16 %v606
        %v1028 = vunpack.c.h.b16 %v606
        %v1029 = vunpack.c.l.b16 %v607
        %v1030 = vunpack.c.h.b16 %v607
        %v1031 = vunpack.c.l.b16 %v608
        %v1032 = vunpack.c.h.b16 %v608
        %v1033 = vunpack.c.l.b16 %v609
        %v1034 = vunpack.c.h.b16 %v609
        %v1035 = vunpack.c.l.b16 %v610
        %v1036 = vunpack.c.h.b16 %v610
        %v1037 = vpack.c.b16 %v789, %v781
        %v1038 = vpack.c.b16 %v790, %v782
        %v1039 = vpack.c.b16 %v791, %v783
        %v1040 = vpack.c.b16 %v792, %v784
        %v1041 = vpack.c.b16 %v793, %v785
        %v1042 = vpack.c.b16 %v794, %v786
        %v1043 = vpack.c.b16 %v795, %v787
        %v1044 = vpack.c.b16 %v796, %v788
        %v1045 = vpack.c.b16 %v805, %v797
        %v1046 = vpack.c.b16 %v806, %v798
        %v1047 = vpack.c.b16 %v807, %v799
        %v1048 = vpack.c.b16 %v808, %v800
        %v1049 = vpack.c.b16 %v809, %v801
        %v1050 = vpack.c.b16 %v810, %v802
        %v1051 = vpack.c.b16 %v811, %v803
        %v1052 = vpack.c.b16 %v812, %v804
        %v1053 = vpack.c.b16 %v821, %v813
        %v1054 = vpack.c.b16 %v822, %v814
        %v1055 = vpack.c.b16 %v823, %v815
        %v1056 = vpack.c.b16 %v824, %v816
        %v1057 = vpack.c.b16 %v825, %v817
        %v1058 = vpack.c.b16 %v826, %v818
        %v1059 = vpack.c.b16 %v827, %v819
        %v1060 = vpack.c.b16 %v828, %v820
        %v1061 = vpack.c.b16 %v837, %v829
        %v1062 = vpack.c.b16 %v838, %v830
        %v1063 = vpack.c.b16 %v839, %v831
        %v1064 = vpack.c.b16 %v840, %v832
        %v1065 = vpack.c.b16 %v841, %v833
        %v1066 = vpack.c.b16 %v842, %v834
        %v1067 = vpack.c.b16 %v843, %v835
        %v1068 = vpack.c.b16 %v844, %v836
        %v1069 = vpack.c.b16 %v853, %v845
        %v1070 = vpack.c.b16 %v854, %v846
        %v1071 = vpack.c.b16 %v855, %v847
        %v1072 = vpack.c.b16 %v856, %v848
        %v1073 = vpack.c.b16 %v857, %v849
        %v1074 = vpack.c.b16 %v858, %v850
        %v1075 = vpack.c.b16 %v859, %v851
        %v1076 = vpack.c.b16 %v860, %v852
        %v1077 = vpack.c.b16 %v869, %v861
        %v1078 = vpack.c.b16 %v870, %v862
        %v1079 = vpack.c.b16 %v871, %v863
        %v1080 = vpack.c.b16 %v872, %v864
        %v1081 = vpack.c.b16 %v873, %v865
        %v1082 = vpack.c.b16 %v874, %v866
        %v1083 = vpack.c.b16 %v875, %v867
        %v1084 = vpack.c.b16 %v876, %v868
        %v1085 = vpack.c.b16 %v885, %v877
        %v1086 = vpack.c.b16 %v886, %v878
        %v1087 = vpack.c.b16 %v887, %v879
        %v1088 = vpack.c.b16 %v888, %v880
        %v1089 = vpack.c.b16 %v889, %v881
        %v1090 = vpack.c.b16 %v890, %v882
        %v1091 = vpack.c.b16 %v891, %v883
        %v1092 = vpack.c.b16 %v892, %v884
        %v1093 = vpack.c.b16 %v901, %v893
        %v1094 = vpack.c.b16 %v902, %v894
        %v1095 = vpack.c.b16 %v903, %v895
        %v1096 = vpack.c.b16 %v904, %v896
        %v1097 = vpack.c.b16 %v905, %v897
        %v1098 = vpack.c.b16 %v906, %v898
        %v1099 = vpack.c.b16 %v907, %v899
        %v1100 = vpack.c.b16 %v908, %v900
        %v1101 = vpack.c.b16 %v917, %v909
        %v1102 = vpack.c.b16 %v918, %v910
        %v1103 = vpack.c.b16 %v919, %v911
        %v1104 = vpack.c.b16 %v920, %v912
        %v1105 = vpack.c.b16 %v921, %v913
        %v1106 = vpack.c.b16 %v922, %v914
        %v1107 = vpack.c.b16 %v923, %v915
        %v1108 = vpack.c.b16 %v924, %v916
        %v1109 = vpack.c.b16 %v933, %v925
        %v1110 = vpack.c.b16 %v934, %v926
        %v1111 = vpack.c.b16 %v935, %v927
        %v1112 = vpack.c.b16 %v936, %v928
        %v1113 = vpack.c.b16 %v937, %v929
        %v1114 = vpack.c.b16 %v938, %v930
        %v1115 = vpack.c.b16 %v939, %v931
        %v1116 = vpack.c.b16 %v940, %v932
        %v1117 = vpack.c.b16 %v949, %v941
        %v1118 = vpack.c.b16 %v950, %v942
        %v1119 = vpack.c.b16 %v951, %v943
        %v1120 = vpack.c.b16 %v952, %v944
        %v1121 = vpack.c.b16 %v953, %v945
        %v1122 = vpack.c.b16 %v954, %v946
        %v1123 = vpack.c.b16 %v955, %v947
        %v1124 = vpack.c.b16 %v956, %v948
        %v1125 = vpack.c.b16 %v965, %v957
        %v1126 = vpack.c.b16 %v966, %v958
        %v1127 = vpack.c.b16 %v967, %v959
        %v1128 = vpack.c.b16 %v968, %v960
        %v1129 = vpack.c.b16 %v969, %v961
        %v1130 = vpack.c.b16 %v970, %v962
        %v1131 = vpack.c.b16 %v971, %v963
        %v1132 = vpack.c.b16 %v972, %v964
        %v1133 = vpack.c.b16 %v981, %v973
        %v1134 = vpack.c.b16 %v982, %v974
        %v1135 = vpack.c.b16 %v983, %v975
        %v1136 = vpack.c.b16 %v984, %v976
        %v1137 = vpack.c.b16 %v985, %v977
        %v1138 = vpack.c.b16 %v986, %v978
        %v1139 = vpack.c.b16 %v987, %v979
        %v1140 = vpack.c.b16 %v988, %v980
        %v1141 = vpack.c.b16 %v997, %v989
        %v1142 = vpack.c.b16 %v998, %v990
        %v1143 = vpack.c.b16 %v999, %v991
        %v1144 = vpack.c.b16 %v1000, %v992
        %v1145 = vpack.c.b16 %v1001, %v993
        %v1146 = vpack.c.b16 %v1002, %v994
        %v1147 = vpack.c.b16 %v1003, %v995
        %v1148 = vpack.c.b16 %v1004, %v996
        %v1149 = vpack.c.b16 %v1013, %v1005
        %v1150 = vpack.c.b16 %v1014, %v1006
        %v1151 = vpack.c.b16 %v1015, %v1007
        %v1152 = vpack.c.b16 %v1016, %v1008
        %v1153 = vpack.c.b16 %v1017, %v1009
        %v1154 = vpack.c.b16 %v1018, %v1010
        %v1155 = vpack.c.b16 %v1019, %v1011
        %v1156 = vpack.c.b16 %v1020, %v1012
        %v1157 = vpack.c.b16 %v1029, %v1021
        %v1158 = vpack.c.b16 %v1030, %v1022
        %v1159 = vpack.c.b16 %v1031, %v1023
        %v1160 = vpack.c.b16 %v1032, %v1024
        %v1161 = vpack.c.b16 %v1033, %v1025
        %v1162 = vpack.c.b16 %v1034, %v1026
        %v1163 = vpack.c.b16 %v1035, %v1027
        %v1164 = vpack.c.b16 %v1036, %v1028
        %1293 = vmatprep.subr.bf16.mxu0 %v1094
        %1294 = vmatpush1.bf16.msra.mxu0 %v1093
        %1295 = vmatprep.subr.bf16.mxu0 %v1086
        %1296 = vmatpush1.bf16.msra.mxu0 %v1085
        %1297 = vmatprep.subr.bf16.mxu0 %v1078
        %1298 = vmatpush1.bf16.msra.mxu0 %v1077
        %1299 = vmatprep.subr.bf16.mxu0 %v1070
        %1300 = vmatpush1.bf16.msra.mxu0 %v1069
        %1301 = vmatprep.subr.bf16.mxu0 %v1062
        %1302 = vmatpush1.bf16.msra.mxu0 %v1061
        %1303 = vmatprep.subr.bf16.mxu0 %v1054
        %1304 = vmatpush1.bf16.msra.mxu0 %v1053
        %1305 = vmatprep.subr.bf16.mxu0 %v1046
        %1306 = vmatpush1.bf16.msra.mxu0 %v1045
        %1307 = vmatprep.subr.bf16.mxu0 %v1038
        %1308 = vmatpush1.bf16.msra.mxu0 %v1037
        %1309 = vmatprep.subr.bf16.mxu0 %v1158
        %1310 = vmatpush2.bf16.msra.mxu0 %v1157
        %1311 = vmatprep.subr.bf16.mxu0 %v1150
        %1312 = vmatpush2.bf16.msra.mxu0 %v1149
        %1313 = vmatprep.subr.bf16.mxu0 %v1142
        %1314 = vmatpush2.bf16.msra.mxu0 %v1141
        %1315 = vmatprep.subr.bf16.mxu0 %v1134
        %1316 = vmatpush2.bf16.msra.mxu0 %v1133
        %1317 = vmatprep.subr.bf16.mxu0 %v1126
        %1318 = vmatpush2.bf16.msra.mxu0 %v1125
        %1319 = vmatprep.subr.bf16.mxu0 %v1118
        %1320 = vmatpush2.bf16.msra.mxu0 %v1117
        %1321 = vmatprep.subr.bf16.mxu0 %v1110
        %1322 = vmatpush2.bf16.msra.mxu0 %v1109
        %1323 = vmatprep.subr.bf16.mxu0 %v1102
        %1324 = vmatpush2.bf16.msra.mxu0 %v1101
        %1325 = vmatprep.mubr.bf16.mxu0 %v472
        %1326 = vmatmul.mubr.bf16.gmra.mxu0 %v471
        %v1327 = vpop.f32.mrf.mxu0
        %v1328 = vadd.f32 %v616, %v1327
        %v1329 = vpop.f32.mrf.mxu0
        %v1330 = vadd.f32 %v620, %v1329
        %v1331 = vpop.f32.mrf.mxu0
        %v1332 = vadd.f32 %v616, %v1331
        %v1333 = vpop.f32.mrf.mxu0
        %v1334 = vadd.f32 %v620, %v1333
        %1335 = vmatprep.mubr.bf16.mxu0 %v474
        %1336 = vmatmul.mubr.bf16.gmra.mxu0 %v473
        %v1337 = vpop.f32.mrf.mxu0
        %v1338 = vadd.f32 %v616, %v1337
        %v1339 = vpop.f32.mrf.mxu0
        %v1340 = vadd.f32 %v620, %v1339
        %v1341 = vpop.f32.mrf.mxu0
        %v1342 = vadd.f32 %v616, %v1341
        %v1343 = vpop.f32.mrf.mxu0
        %v1344 = vadd.f32 %v620, %v1343
        %1345 = vmatprep.mubr.bf16.mxu0 %v476
        %1346 = vmatmul.mubr.bf16.gmra.mxu0 %v475
        %v1347 = vpop.f32.mrf.mxu0
        %v1348 = vadd.f32 %v616, %v1347
        %v1349 = vpop.f32.mrf.mxu0
        %v1350 = vadd.f32 %v620, %v1349
        %v1351 = vpop.f32.mrf.mxu0
        %v1352 = vadd.f32 %v616, %v1351
        %v1353 = vpop.f32.mrf.mxu0
        %v1354 = vadd.f32 %v620, %v1353
        %1355 = vmatprep.mubr.bf16.mxu0 %v478
        %1356 = vmatmul.mubr.bf16.gmra.mxu0 %v477
        %v1357 = vpop.f32.mrf.mxu0
        %v1358 = vadd.f32 %v616, %v1357
        %v1359 = vpop.f32.mrf.mxu0
        %v1360 = vadd.f32 %v620, %v1359
        %v1361 = vpop.f32.mrf.mxu0
        %v1362 = vadd.f32 %v616, %v1361
        %v1363 = vpop.f32.mrf.mxu0
        %v1364 = vadd.f32 %v620, %v1363
        %1365 = vmatprep.mubr.bf16.mxu0 %v480
        %1366 = vmatmul.mubr.bf16.gmra.mxu0 %v479
        %v1367 = vpop.f32.mrf.mxu0
        %v1368 = vadd.f32 %v616, %v1367
        %v1369 = vpop.f32.mrf.mxu0
        %v1370 = vadd.f32 %v620, %v1369
        %v1371 = vpop.f32.mrf.mxu0
        %v1372 = vadd.f32 %v616, %v1371
        %v1373 = vpop.f32.mrf.mxu0
        %v1374 = vadd.f32 %v620, %v1373
        %1375 = vmatprep.mubr.bf16.mxu0 %v482
        %1376 = vmatmul.mubr.bf16.gmra.mxu0 %v481
        %v1377 = vpop.f32.mrf.mxu0
        %v1378 = vadd.f32 %v616, %v1377
        %v1379 = vpop.f32.mrf.mxu0
        %v1380 = vadd.f32 %v620, %v1379
        %v1381 = vpop.f32.mrf.mxu0
        %v1382 = vadd.f32 %v616, %v1381
        %v1383 = vpop.f32.mrf.mxu0
        %v1384 = vadd.f32 %v620, %v1383
        %1385 = vdwg.mxu0
        %1386 = vmatprep.subr.bf16.mxu0 %v1096
        %1387 = vmatpush1.bf16.msra.mxu0 %v1095
        %1388 = vmatprep.subr.bf16.mxu0 %v1088
        %1389 = vmatpush1.bf16.msra.mxu0 %v1087
        %1390 = vmatprep.subr.bf16.mxu0 %v1080
        %1391 = vmatpush1.bf16.msra.mxu0 %v1079
        %1392 = vmatprep.subr.bf16.mxu0 %v1072
        %1393 = vmatpush1.bf16.msra.mxu0 %v1071
        %1394 = vmatprep.subr.bf16.mxu0 %v1064
        %1395 = vmatpush1.bf16.msra.mxu0 %v1063
        %1396 = vmatprep.subr.bf16.mxu0 %v1056
        %1397 = vmatpush1.bf16.msra.mxu0 %v1055
        %1398 = vmatprep.subr.bf16.mxu0 %v1048
        %1399 = vmatpush1.bf16.msra.mxu0 %v1047
        %1400 = vmatprep.subr.bf16.mxu0 %v1040
        %1401 = vmatpush1.bf16.msra.mxu0 %v1039
        %1402 = vmatprep.subr.bf16.mxu0 %v1160
        %1403 = vmatpush2.bf16.msra.mxu0 %v1159
        %1404 = vmatprep.subr.bf16.mxu0 %v1152
        %1405 = vmatpush2.bf16.msra.mxu0 %v1151
        %1406 = vmatprep.subr.bf16.mxu0 %v1144
        %1407 = vmatpush2.bf16.msra.mxu0 %v1143
        %1408 = vmatprep.subr.bf16.mxu0 %v1136
        %1409 = vmatpush2.bf16.msra.mxu0 %v1135
        %1410 = vmatprep.subr.bf16.mxu0 %v1128
        %1411 = vmatpush2.bf16.msra.mxu0 %v1127
        %1412 = vmatprep.subr.bf16.mxu0 %v1120
        %1413 = vmatpush2.bf16.msra.mxu0 %v1119
        %1414 = vmatprep.subr.bf16.mxu0 %v1112
        %1415 = vmatpush2.bf16.msra.mxu0 %v1111
        %1416 = vmatprep.subr.bf16.mxu0 %v1104
        %1417 = vmatpush2.bf16.msra.mxu0 %v1103
        %1418 = vmatprep.mubr.bf16.mxu0 %v472
        %1419 = vmatmul.mubr.bf16.gmra.mxu0 %v471
        %v1420 = vpop.f32.mrf.mxu0
        %v1421 = vadd.f32 %v624, %v1420
        %v1422 = vpop.f32.mrf.mxu0
        %v1423 = vadd.f32 %v628, %v1422
        %v1424 = vpop.f32.mrf.mxu0
        %v1425 = vadd.f32 %v624, %v1424
        %v1426 = vpop.f32.mrf.mxu0
        %v1427 = vadd.f32 %v628, %v1426
        %1428 = vmatprep.mubr.bf16.mxu0 %v474
        %1429 = vmatmul.mubr.bf16.gmra.mxu0 %v473
        %v1430 = vpop.f32.mrf.mxu0
        %v1431 = vadd.f32 %v624, %v1430
        %v1432 = vpop.f32.mrf.mxu0
        %v1433 = vadd.f32 %v628, %v1432
        %v1434 = vpop.f32.mrf.mxu0
        %v1435 = vadd.f32 %v624, %v1434
        %v1436 = vpop.f32.mrf.mxu0
        %v1437 = vadd.f32 %v628, %v1436
        %1438 = vmatprep.mubr.bf16.mxu0 %v476
        %1439 = vmatmul.mubr.bf16.gmra.mxu0 %v475
        %v1440 = vpop.f32.mrf.mxu0
        %v1441 = vadd.f32 %v624, %v1440
        %v1442 = vpop.f32.mrf.mxu0
        %v1443 = vadd.f32 %v628, %v1442
        %v1444 = vpop.f32.mrf.mxu0
        %v1445 = vadd.f32 %v624, %v1444
        %v1446 = vpop.f32.mrf.mxu0
        %v1447 = vadd.f32 %v628, %v1446
        %1448 = vmatprep.mubr.bf16.mxu0 %v478
        %1449 = vmatmul.mubr.bf16.gmra.mxu0 %v477
        %v1450 = vpop.f32.mrf.mxu0
        %v1451 = vadd.f32 %v624, %v1450
        %v1452 = vpop.f32.mrf.mxu0
        %v1453 = vadd.f32 %v628, %v1452
        %v1454 = vpop.f32.mrf.mxu0
        %v1455 = vadd.f32 %v624, %v1454
        %v1456 = vpop.f32.mrf.mxu0
        %v1457 = vadd.f32 %v628, %v1456
        %1458 = vmatprep.mubr.bf16.mxu0 %v480
        %1459 = vmatmul.mubr.bf16.gmra.mxu0 %v479
        %v1460 = vpop.f32.mrf.mxu0
        %v1461 = vadd.f32 %v624, %v1460
        %v1462 = vpop.f32.mrf.mxu0
        %v1463 = vadd.f32 %v628, %v1462
        %v1464 = vpop.f32.mrf.mxu0
        %v1465 = vadd.f32 %v624, %v1464
        %v1466 = vpop.f32.mrf.mxu0
        %v1467 = vadd.f32 %v628, %v1466
        %1468 = vmatprep.mubr.bf16.mxu0 %v482
        %1469 = vmatmul.mubr.bf16.gmra.mxu0 %v481
        %v1470 = vpop.f32.mrf.mxu0
        %v1471 = vadd.f32 %v624, %v1470
        %v1472 = vpop.f32.mrf.mxu0
        %v1473 = vadd.f32 %v628, %v1472
        %v1474 = vpop.f32.mrf.mxu0
        %v1475 = vadd.f32 %v624, %v1474
        %v1476 = vpop.f32.mrf.mxu0
        %v1477 = vadd.f32 %v628, %v1476
        %1478 = vdwg.mxu0
        %1479 = vmatprep.subr.bf16.mxu0 %v1098
        %1480 = vmatpush1.bf16.msra.mxu0 %v1097
        %1481 = vmatprep.subr.bf16.mxu0 %v1090
        %1482 = vmatpush1.bf16.msra.mxu0 %v1089
        %1483 = vmatprep.subr.bf16.mxu0 %v1082
        %1484 = vmatpush1.bf16.msra.mxu0 %v1081
        %1485 = vmatprep.subr.bf16.mxu0 %v1074
        %1486 = vmatpush1.bf16.msra.mxu0 %v1073
        %1487 = vmatprep.subr.bf16.mxu0 %v1066
        %1488 = vmatpush1.bf16.msra.mxu0 %v1065
        %1489 = vmatprep.subr.bf16.mxu0 %v1058
        %1490 = vmatpush1.bf16.msra.mxu0 %v1057
        %1491 = vmatprep.subr.bf16.mxu0 %v1050
        %1492 = vmatpush1.bf16.msra.mxu0 %v1049
        %1493 = vmatprep.subr.bf16.mxu0 %v1042
        %1494 = vmatpush1.bf16.msra.mxu0 %v1041
        %1495 = vmatprep.subr.bf16.mxu0 %v1162
        %1496 = vmatpush2.bf16.msra.mxu0 %v1161
        %1497 = vmatprep.subr.bf16.mxu0 %v1154
        %1498 = vmatpush2.bf16.msra.mxu0 %v1153
        %1499 = vmatprep.subr.bf16.mxu0 %v1146
        %1500 = vmatpush2.bf16.msra.mxu0 %v1145
        %1501 = vmatprep.subr.bf16.mxu0 %v1138
        %1502 = vmatpush2.bf16.msra.mxu0 %v1137
        %1503 = vmatprep.subr.bf16.mxu0 %v1130
        %1504 = vmatpush2.bf16.msra.mxu0 %v1129
        %1505 = vmatprep.subr.bf16.mxu0 %v1122
        %1506 = vmatpush2.bf16.msra.mxu0 %v1121
        %1507 = vmatprep.subr.bf16.mxu0 %v1114
        %1508 = vmatpush2.bf16.msra.mxu0 %v1113
        %1509 = vmatprep.subr.bf16.mxu0 %v1106
        %1510 = vmatpush2.bf16.msra.mxu0 %v1105
        %1511 = vmatprep.mubr.bf16.mxu0 %v472
        %1512 = vmatmul.mubr.bf16.gmra.mxu0 %v471
        %v1513 = vpop.f32.mrf.mxu0
        %v1514 = vadd.f32 %v632, %v1513
        %v1515 = vpop.f32.mrf.mxu0
        %v1516 = vadd.f32 %v636, %v1515
        %v1517 = vpop.f32.mrf.mxu0
        %v1518 = vadd.f32 %v632, %v1517
        %v1519 = vpop.f32.mrf.mxu0
        %v1520 = vadd.f32 %v636, %v1519
        %1521 = vmatprep.mubr.bf16.mxu0 %v474
        %1522 = vmatmul.mubr.bf16.gmra.mxu0 %v473
        %v1523 = vpop.f32.mrf.mxu0
        %v1524 = vadd.f32 %v632, %v1523
        %v1525 = vpop.f32.mrf.mxu0
        %v1526 = vadd.f32 %v636, %v1525
        %v1527 = vpop.f32.mrf.mxu0
        %v1528 = vadd.f32 %v632, %v1527
        %v1529 = vpop.f32.mrf.mxu0
        %v1530 = vadd.f32 %v636, %v1529
        %1531 = vmatprep.mubr.bf16.mxu0 %v476
        %1532 = vmatmul.mubr.bf16.gmra.mxu0 %v475
        %v1533 = vpop.f32.mrf.mxu0
        %v1534 = vadd.f32 %v632, %v1533
        %v1535 = vpop.f32.mrf.mxu0
        %v1536 = vadd.f32 %v636, %v1535
        %v1537 = vpop.f32.mrf.mxu0
        %v1538 = vadd.f32 %v632, %v1537
        %v1539 = vpop.f32.mrf.mxu0
        %v1540 = vadd.f32 %v636, %v1539
        %1541 = vmatprep.mubr.bf16.mxu0 %v478
        %1542 = vmatmul.mubr.bf16.gmra.mxu0 %v477
        %v1543 = vpop.f32.mrf.mxu0
        %v1544 = vadd.f32 %v632, %v1543
        %v1545 = vpop.f32.mrf.mxu0
        %v1546 = vadd.f32 %v636, %v1545
        %v1547 = vpop.f32.mrf.mxu0
        %v1548 = vadd.f32 %v632, %v1547
        %v1549 = vpop.f32.mrf.mxu0
        %v1550 = vadd.f32 %v636, %v1549
        %1551 = vmatprep.mubr.bf16.mxu0 %v480
        %1552 = vmatmul.mubr.bf16.gmra.mxu0 %v479
        %v1553 = vpop.f32.mrf.mxu0
        %v1554 = vadd.f32 %v632, %v1553
        %v1555 = vpop.f32.mrf.mxu0
        %v1556 = vadd.f32 %v636, %v1555
        %v1557 = vpop.f32.mrf.mxu0
        %v1558 = vadd.f32 %v632, %v1557
        %v1559 = vpop.f32.mrf.mxu0
        %v1560 = vadd.f32 %v636, %v1559
        %1561 = vmatprep.mubr.bf16.mxu0 %v482
        %1562 = vmatmul.mubr.bf16.gmra.mxu0 %v481
        %v1563 = vpop.f32.mrf.mxu0
        %v1564 = vadd.f32 %v632, %v1563
        %v1565 = vpop.f32.mrf.mxu0
        %v1566 = vadd.f32 %v636, %v1565
        %v1567 = vpop.f32.mrf.mxu0
        %v1568 = vadd.f32 %v632, %v1567
        %v1569 = vpop.f32.mrf.mxu0
        %v1570 = vadd.f32 %v636, %v1569
        %1571 = vdwg.mxu0
        %1572 = vmatprep.subr.bf16.mxu0 %v1100
        %1573 = vmatpush1.bf16.msra.mxu0 %v1099
        %1574 = vmatprep.subr.bf16.mxu0 %v1092
        %1575 = vmatpush1.bf16.msra.mxu0 %v1091
        %1576 = vmatprep.subr.bf16.mxu0 %v1084
        %1577 = vmatpush1.bf16.msra.mxu0 %v1083
        %1578 = vmatprep.subr.bf16.mxu0 %v1076
        %1579 = vmatpush1.bf16.msra.mxu0 %v1075
        %1580 = vmatprep.subr.bf16.mxu0 %v1068
        %1581 = vmatpush1.bf16.msra.mxu0 %v1067
        %1582 = vmatprep.subr.bf16.mxu0 %v1060
        %1583 = vmatpush1.bf16.msra.mxu0 %v1059
        %1584 = vmatprep.subr.bf16.mxu0 %v1052
        %1585 = vmatpush1.bf16.msra.mxu0 %v1051
        %1586 = vmatprep.subr.bf16.mxu0 %v1044
        %1587 = vmatpush1.bf16.msra.mxu0 %v1043
        %1588 = vmatprep.subr.bf16.mxu0 %v1164
        %1589 = vmatpush2.bf16.msra.mxu0 %v1163
        %1590 = vmatprep.subr.bf16.mxu0 %v1156
        %1591 = vmatpush2.bf16.msra.mxu0 %v1155
        %1592 = vmatprep.subr.bf16.mxu0 %v1148
        %1593 = vmatpush2.bf16.msra.mxu0 %v1147
        %1594 = vmatprep.subr.bf16.mxu0 %v1140
        %1595 = vmatpush2.bf16.msra.mxu0 %v1139
        %1596 = vmatprep.subr.bf16.mxu0 %v1132
        %1597 = vmatpush2.bf16.msra.mxu0 %v1131
        %1598 = vmatprep.subr.bf16.mxu0 %v1124
        %1599 = vmatpush2.bf16.msra.mxu0 %v1123
        %1600 = vmatprep.subr.bf16.mxu0 %v1116
        %1601 = vmatpush2.bf16.msra.mxu0 %v1115
        %1602 = vmatprep.subr.bf16.mxu0 %v1108
        %1603 = vmatpush2.bf16.msra.mxu0 %v1107
        %1604 = vmatprep.mubr.bf16.mxu0 %v472
        %1605 = vmatmul.mubr.bf16.gmra.mxu0 %v471
        %v1606 = vpop.f32.mrf.mxu0
        %v1607 = vadd.f32 %v640, %v1606
        %v1608 = vpop.f32.mrf.mxu0
        %v1609 = vadd.f32 %v644, %v1608
        %v1610 = vpop.f32.mrf.mxu0
        %v1611 = vadd.f32 %v640, %v1610
        %v1612 = vpop.f32.mrf.mxu0
        %v1613 = vadd.f32 %v644, %v1612
        %1614 = vmatprep.mubr.bf16.mxu0 %v474
        %1615 = vmatmul.mubr.bf16.gmra.mxu0 %v473
        %v1616 = vpop.f32.mrf.mxu0
        %v1617 = vadd.f32 %v640, %v1616
        %v1618 = vpop.f32.mrf.mxu0
        %v1619 = vadd.f32 %v644, %v1618
        %v1620 = vpop.f32.mrf.mxu0
        %v1621 = vadd.f32 %v640, %v1620
        %v1622 = vpop.f32.mrf.mxu0
        %v1623 = vadd.f32 %v644, %v1622
        %1624 = vmatprep.mubr.bf16.mxu0 %v476
        %1625 = vmatmul.mubr.bf16.gmra.mxu0 %v475
        %v1626 = vpop.f32.mrf.mxu0
        %v1627 = vadd.f32 %v640, %v1626
        %v1628 = vpop.f32.mrf.mxu0
        %v1629 = vadd.f32 %v644, %v1628
        %v1630 = vpop.f32.mrf.mxu0
        %v1631 = vadd.f32 %v640, %v1630
        %v1632 = vpop.f32.mrf.mxu0
        %v1633 = vadd.f32 %v644, %v1632
        %1634 = vmatprep.mubr.bf16.mxu0 %v478
        %1635 = vmatmul.mubr.bf16.gmra.mxu0 %v477
        %v1636 = vpop.f32.mrf.mxu0
        %v1637 = vadd.f32 %v640, %v1636
        %v1638 = vpop.f32.mrf.mxu0
        %v1639 = vadd.f32 %v644, %v1638
        %v1640 = vpop.f32.mrf.mxu0
        %v1641 = vadd.f32 %v640, %v1640
        %v1642 = vpop.f32.mrf.mxu0
        %v1643 = vadd.f32 %v644, %v1642
        %1644 = vmatprep.mubr.bf16.mxu0 %v480
        %1645 = vmatmul.mubr.bf16.gmra.mxu0 %v479
        %v1646 = vpop.f32.mrf.mxu0
        %v1647 = vadd.f32 %v640, %v1646
        %v1648 = vpop.f32.mrf.mxu0
        %v1649 = vadd.f32 %v644, %v1648
        %v1650 = vpop.f32.mrf.mxu0
        %v1651 = vadd.f32 %v640, %v1650
        %v1652 = vpop.f32.mrf.mxu0
        %v1653 = vadd.f32 %v644, %v1652
        %1654 = vmatprep.mubr.bf16.mxu0 %v482
        %1655 = vmatmul.mubr.bf16.gmra.mxu0 %v481
        %v1656 = vpop.f32.mrf.mxu0
        %v1657 = vadd.f32 %v640, %v1656
        %v1658 = vpop.f32.mrf.mxu0
        %v1659 = vadd.f32 %v644, %v1658
        %v1660 = vpop.f32.mrf.mxu0
        %v1661 = vadd.f32 %v640, %v1660
        %v1662 = vpop.f32.mrf.mxu0
        %v1663 = vadd.f32 %v644, %v1662
        %1664 = vdwg.mxu0
        %1665 = vst [vmem:[%s216] sm:$0xff] %v1328
        %1666 = vst [vmem:[%s216 + $0x8] sm:$0xff] %v1330
        %1667 = vst [vmem:[%s216 + $0x10] sm:$0xff] %v1421
        %1668 = vst [vmem:[%s216 + $0x18] sm:$0xff] %v1423
        %1669 = vst [vmem:[%s216 + $0x20] sm:$0xff] %v1514
        %1670 = vst [vmem:[%s216 + $0x28] sm:$0xff] %v1516
        %1671 = vst [vmem:[%s216 + $0x30] sm:$0xff] %v1607
        %1672 = vst [vmem:[%s216 + $0x38] sm:$0xff] %v1609
        %1673 = vst [vmem:[%s216 + $0x40] sm:$0xff] %v1332
        %1674 = vst [vmem:[%s216 + $0x48] sm:$0xff] %v1334
        %1675 = vst [vmem:[%s216 + $0x50] sm:$0xff] %v1425
        %1676 = vst [vmem:[%s216 + $0x58] sm:$0xff] %v1427
        %1677 = vst [vmem:[%s216 + $0x60] sm:$0xff] %v1518
        %1678 = vst [vmem:[%s216 + $0x68] sm:$0xff] %v1520
        %1679 = vst [vmem:[%s216 + $0x70] sm:$0xff] %v1611
        %1680 = vst [vmem:[%s216 + $0x78] sm:$0xff] %v1613
        %1681 = vst [vmem:[%s216 + $0x80] sm:$0xff] %v1338
        %1682 = vst [vmem:[%s216 + $0x88] sm:$0xff] %v1340
        %1683 = vst [vmem:[%s216 + $0x90] sm:$0xff] %v1431
        %1684 = vst [vmem:[%s216 + $0x98] sm:$0xff] %v1433
        %1685 = vst [vmem:[%s216 + $0xa0] sm:$0xff] %v1524
        %1686 = vst [vmem:[%s216 + $0xa8] sm:$0xff] %v1526
        %1687 = vst [vmem:[%s216 + $0xb0] sm:$0xff] %v1617
        %1688 = vst [vmem:[%s216 + $0xb8] sm:$0xff] %v1619
        %1689 = vst [vmem:[%s216 + $0xc0] sm:$0xff] %v1342
        %1690 = vst [vmem:[%s216 + $0xc8] sm:$0xff] %v1344
        %1691 = vst [vmem:[%s216 + $0xd0] sm:$0xff] %v1435
        %1692 = vst [vmem:[%s216 + $0xd8] sm:$0xff] %v1437
        %1693 = vst [vmem:[%s216 + $0xe0] sm:$0xff] %v1528
        %1694 = vst [vmem:[%s216 + $0xe8] sm:$0xff] %v1530
        %1695 = vst [vmem:[%s216 + $0xf0] sm:$0xff] %v1621
        %1696 = vst [vmem:[%s216 + $0xf8] sm:$0xff] %v1623
        %1697 = vst [vmem:[%s216 + $0x100] sm:$0xff] %v1348
        %1698 = vst [vmem:[%s216 + $0x108] sm:$0xff] %v1350
        %1699 = vst [vmem:[%s216 + $0x110] sm:$0xff] %v1441
        %1700 = vst [vmem:[%s216 + $0x118] sm:$0xff] %v1443
        %1701 = vst [vmem:[%s216 + $0x120] sm:$0xff] %v1534
        %1702 = vst [vmem:[%s216 + $0x128] sm:$0xff] %v1536
        %1703 = vst [vmem:[%s216 + $0x130] sm:$0xff] %v1627
        %1704 = vst [vmem:[%s216 + $0x138] sm:$0xff] %v1629
        %1705 = vst [vmem:[%s216 + $0x140] sm:$0xff] %v1352
        %1706 = vst [vmem:[%s216 + $0x148] sm:$0xff] %v1354
        %1707 = vst [vmem:[%s216 + $0x150] sm:$0xff] %v1445
        %1708 = vst [vmem:[%s216 + $0x158] sm:$0xff] %v1447
        %1709 = vst [vmem:[%s216 + $0x160] sm:$0xff] %v1538
        %1710 = vst [vmem:[%s216 + $0x168] sm:$0xff] %v1540
        %1711 = vst [vmem:[%s216 + $0x170] sm:$0xff] %v1631
        %1712 = vst [vmem:[%s216 + $0x178] sm:$0xff] %v1633
        %1713 = vst [vmem:[%s216 + $0x180] sm:$0xff] %v1358
        %1714 = vst [vmem:[%s216 + $0x188] sm:$0xff] %v1360
        %1715 = vst [vmem:[%s216 + $0x190] sm:$0xff] %v1451
        %1716 = vst [vmem:[%s216 + $0x198] sm:$0xff] %v1453
        %1717 = vst [vmem:[%s216 + $0x1a0] sm:$0xff] %v1544
        %1718 = vst [vmem:[%s216 + $0x1a8] sm:$0xff] %v1546
        %1719 = vst [vmem:[%s216 + $0x1b0] sm:$0xff] %v1637
        %1720 = vst [vmem:[%s216 + $0x1b8] sm:$0xff] %v1639
        %1721 = vst [vmem:[%s216 + $0x1c0] sm:$0xff] %v1362
        %1722 = vst [vmem:[%s216 + $0x1c8] sm:$0xff] %v1364
        %1723 = vst [vmem:[%s216 + $0x1d0] sm:$0xff] %v1455
        %1724 = vst [vmem:[%s216 + $0x1d8] sm:$0xff] %v1457
        %1725 = vst [vmem:[%s216 + $0x1e0] sm:$0xff] %v1548
        %1726 = vst [vmem:[%s216 + $0x1e8] sm:$0xff] %v1550
        %1727 = vst [vmem:[%s216 + $0x1f0] sm:$0xff] %v1641
        %1728 = vst [vmem:[%s216 + $0x1f8] sm:$0xff] %v1643
        %1729 = vst [vmem:[%s216 + $0x200] sm:$0xff] %v1368
        %1730 = vst [vmem:[%s216 + $0x208] sm:$0xff] %v1370
        %1731 = vst [vmem:[%s216 + $0x210] sm:$0xff] %v1461
        %1732 = vst [vmem:[%s216 + $0x218] sm:$0xff] %v1463
        %1733 = vst [vmem:[%s216 + $0x220] sm:$0xff] %v1554
        %1734 = vst [vmem:[%s216 + $0x228] sm:$0xff] %v1556
        %1735 = vst [vmem:[%s216 + $0x230] sm:$0xff] %v1647
        %1736 = vst [vmem:[%s216 + $0x238] sm:$0xff] %v1649
        %1737 = vst [vmem:[%s216 + $0x240] sm:$0xff] %v1372
        %1738 = vst [vmem:[%s216 + $0x248] sm:$0xff] %v1374
        %1739 = vst [vmem:[%s216 + $0x250] sm:$0xff] %v1465
        %1740 = vst [vmem:[%s216 + $0x258] sm:$0xff] %v1467
        %1741 = vst [vmem:[%s216 + $0x260] sm:$0xff] %v1558
        %1742 = vst [vmem:[%s216 + $0x268] sm:$0xff] %v1560
        %1743 = vst [vmem:[%s216 + $0x270] sm:$0xff] %v1651
        %1744 = vst [vmem:[%s216 + $0x278] sm:$0xff] %v1653
        %1745 = vst [vmem:[%s216 + $0x280] sm:$0xff] %v1378
        %1746 = vst [vmem:[%s216 + $0x288] sm:$0xff] %v1380
        %1747 = vst [vmem:[%s216 + $0x290] sm:$0xff] %v1471
        %1748 = vst [vmem:[%s216 + $0x298] sm:$0xff] %v1473
        %1749 = vst [vmem:[%s216 + $0x2a0] sm:$0xff] %v1564
        %1750 = vst [vmem:[%s216 + $0x2a8] sm:$0xff] %v1566
        %1751 = vst [vmem:[%s216 + $0x2b0] sm:$0xff] %v1657
        %1752 = vst [vmem:[%s216 + $0x2b8] sm:$0xff] %v1659
        %1753 = vst [vmem:[%s216 + $0x2c0] sm:$0xff] %v1382
        %1754 = vst [vmem:[%s216 + $0x2c8] sm:$0xff] %v1384
        %1755 = vst [vmem:[%s216 + $0x2d0] sm:$0xff] %v1475
        %1756 = vst [vmem:[%s216 + $0x2d8] sm:$0xff] %v1477
        %1757 = vst [vmem:[%s216 + $0x2e0] sm:$0xff] %v1568
        %1758 = vst [vmem:[%s216 + $0x2e8] sm:$0xff] %v1570
        %1759 = vst [vmem:[%s216 + $0x2f0] sm:$0xff] %v1661
        %1760 = vst [vmem:[%s216 + $0x2f8] sm:$0xff] %v1663
        %s1761 = sand.u32 %s97, 1
        %s1762 = scalar_lea.sflag [#allocation4], %s1761
        %s1763 = sand.u32 %s97, 1
        %s1764 = smul.addr %s1763, 768
        %s1765 = scalar_lea.vmem [#allocation8], %s1764
        // Predicated region
        $region45: #{tpu_custom_call.1} parent=31 // pred_check
          %p1766 = pneg %p107
        $region46: #{tpu_custom_call.1} parent=31 // pred_check_branch
          %1768 = sbr.rel (%p1766) target = $region48
        $region47: #{tpu_custom_call.1} parent=31 // pred_region
          %s1769 = smul.u32 12, %s21
          %s1771 = ssub.s32 12288, 12288
          %1772 = vsyncadd %s1762, %s1771
          %s1773 = smul.addr %s1769, 8
          %s1774 = smul.addr %s1773, 128
          %s1775 = scalar_lea.hbm %s3, %s1774
          %s1776 = sshll.u32 %s1765, 4
          %s1777 = int_to_ptr.vmem [resolvable:$true] %s1776
          %1782 = dma.vmem_to_hbm [thread:$0]  %s1777, 12288, %s1775, %s1762, 1024, 1024, 64
        $region48: #{tpu_custom_call.1} parent=31 // pred_fallthru
          _
      $region32: #{tpu_custom_call.1} parent=5 // pred_fallthru
        _
      %p1783 = scmp.le.s32.totalorder 2, %s16
      // Predicated region
      $region49: #{tpu_custom_call.1} parent=5 // pred_check
        %p1784 = pneg %p1783
      $region50: #{tpu_custom_call.1} parent=5 // pred_check_branch
        %1786 = sbr.rel (%p1784) target = $region52
      $region51: #{tpu_custom_call.1} parent=5 // pred_region
        %s1787 = ssub.s32 %s16, 2
        // Predicated region
        $region53: #{tpu_custom_call.1} parent=51 // pred_check
          %p1788 = pneg %p113
        $region54: #{tpu_custom_call.1} parent=51 // pred_check_branch
          %1790 = sbr.rel (%p1788) target = $region56
        $region55: #{tpu_custom_call.1} parent=51 // pred_region
          %s1791 = sand.u32 %s98, 1
          %s1792 = scalar_lea.sflag [#allocation4], %s1791
          %s1793 = sand.u32 %s98, 1
          %s1794 = smul.addr %s1793, 768
          %s1795 = scalar_lea.vmem [#allocation8], %s1794
          %1796 = dma.done %s1792, 12288
        $region56: #{tpu_custom_call.1} parent=51 // pred_fallthru
          _
      $region52: #{tpu_custom_call.1} parent=5 // pred_fallthru
        _
    $region6: #{tpu_custom_call.1} parent=1 // loop_footer
      %s20 = sadd.s32 1, %s16
    $region7: #{tpu_custom_call.1} parent=1 // loop_footer_branch
      %15 = sbr.rel target = $region3
    $region8: #{tpu_custom_call.1} parent=1 // loop_exit
      _
    %1797 = vsyncpa [#allocation3], 1
    %s1798 = scalar_lea.sflag [#allocation3], 1
    %1799 = vsyncpa %s1798, 1
    %1800 = vsyncpa [#allocation6], 1
    %1801 = vsyncpa [#allocation4], 1
    %s1802 = scalar_lea.sflag [#allocation4], 1
    %1803 = vsyncpa %s1802, 1

</llo_original>
